<compile_context>
chip_gen: v5e
topology: v5e:2x2
jax: 0.10.0
libtpu: 0.0.40
codegen_flags: <defaults>
</compile_context>

<pallas_src>
import numpy as np
import jax
import jax.numpy as jnp
from jax.experimental import pallas as pl
from jax.experimental.pallas import tpu as pltpu


# ----------------------------------------------------------------------------
# Fused Pallas kernel: preprocessing + attention encoder + dueling heads
# (one grid step == one batch element)
# ----------------------------------------------------------------------------
def fused_dqn_kernel(
    boards_ref,               # (S, 1) int32   state||goal tokens of this batch, values in [0, C]
    pe_ref,                   # (S, C) f32     positional encoding ([pe_L ; pe_L])
    wq_ref, bq_ref,           # (C, C), (1, C)  q proj (softmax scale pre-folded)
    wk_ref, bk_ref,           # (C, C), (1, C)  k proj
    wvo_ref, bvo_ref,         # (C, C), (1, C)  Wv @ Wo fold, bias = bv@Wo + bo
    wf1_ref, bf1_ref,         # (C, F), (1, F)
    wf2_ref, bf2_ref,         # (F, C), (1, C)
    w1_ref,                   # (C, S, H2)      head-1 weights, rows grouped by channel
    b1_ref,                   # (1, H2)         fused head-1 bias (value || advantage)
    w2_ref, b2_ref,           # (H2, A), (1, A) head-2 with value + mean-centering folded in
    q_ref,                    # (1, A) output block
):
    f32 = jnp.float32
    S, C = pe_ref.shape

    # ---- preprocessing: one_hot(board, C+1)[..., 1:] + positional encoding ----
    board = boards_ref[...]                                               # (S, 1) int32
    cls = jax.lax.broadcasted_iota(jnp.int32, (S, C), 1) + 1              # classes 1..C
    x = jnp.where(board == cls, 1.0, 0.0).astype(f32) + pe_ref[...]       # (S, C)

    # ---- single-head self-attention (nn.MultiheadAttention), scale & Wo pre-folded ----
    q = jnp.dot(x, wq_ref[...], preferred_element_type=f32) + bq_ref[...]   # (S, C)
    k = jnp.dot(x, wk_ref[...], preferred_element_type=f32) + bk_ref[...]   # (S, C)
    vo = jnp.dot(x, wvo_ref[...], preferred_element_type=f32)               # (S, C)
    scores = jax.lax.dot_general(q, k, (((1,), (1,)), ((), ())),
                                 preferred_element_type=f32)                # (S, S)
    scores = scores - jnp.max(scores, axis=-1, keepdims=True)
    p = jnp.exp(scores)
    attn = p * pl.reciprocal(jnp.sum(p, axis=-1, keepdims=True), approx=True)
    sa = jnp.dot(attn, vo, preferred_element_type=f32) + bvo_ref[...]       # (S, C)
    x1 = sa + x                                                             # residual 1

    # ---- feed-forward block: relu(Linear2(relu(Linear1(x)))) + residual ----
    h = jnp.maximum(
        jnp.dot(x1, wf1_ref[...], preferred_element_type=f32) + bf1_ref[...], 0.0)
    ff = jnp.maximum(
        jnp.dot(h, wf2_ref[...], preferred_element_type=f32) + bf2_ref[...], 0.0)
    x2 = ff + x1                                                            # (S, C)

    # ---- 'l c -> (l c)' flatten + dueling first layer, without any reshape/slab ----
    # feat @ W1 = sum_l sum_c x2[l,c] * W1[l*C+c, :]  with w1_ref[c, l, :] = W1[l*C+c, :]
    acc = x2[:, 0:1] * w1_ref[0]                                            # (S, H2)
    for c in range(1, C):
        acc = acc + x2[:, c:c + 1] * w1_ref[c]
    h1 = jnp.maximum(jnp.sum(acc, axis=0, keepdims=True) + b1_ref[...], 0.0)  # (1, H2)

    # ---- dueling head-2: q = value + adv - mean(adv), pre-folded into one weight ----
    q_ref[...] = jnp.dot(h1, w2_ref[...], preferred_element_type=f32) + b2_ref[...]


# ----------------------------------------------------------------------------
# pallas_call wrapper
# ----------------------------------------------------------------------------
def dueling_dqn_attention_mini_forward(state, goal, packed_arrays, meta):
    S, A = meta["S"], meta["A"]
    B = state.shape[0]
    L = S // 2
    boards = jnp.concatenate(
        [state.reshape(B, L), goal.reshape(B, L)], axis=1
    ).astype(jnp.int32).reshape(B, S, 1)

    def const_spec(a):
        nd = a.ndim
        return pl.BlockSpec(a.shape, lambda b, _nd=nd: (0,) * _nd)

    in_specs = [pl.BlockSpec((None, S, 1), lambda b: (b, 0, 0))]
    in_specs += [const_spec(a) for a in packed_arrays]

    out = pl.pallas_call(
        fused_dqn_kernel,
        out_shape=jax.ShapeDtypeStruct((B, 1, A), jnp.float32),
        grid_spec=pltpu.PrefetchScalarGridSpec(
            num_scalar_prefetch=0,
            grid=(B,),
            in_specs=in_specs,
            out_specs=pl.BlockSpec((None, 1, A), lambda b: (b, 0, 0)),
        ),
        compiler_params=pltpu.CompilerParams(dimension_semantics=("parallel",)),
    )(boards, *packed_arrays)
    return out.reshape(B, A)


# ----------------------------------------------------------------------------
# Host-side constant / weight packing (numpy, done once)
# ----------------------------------------------------------------------------
def positional_encoding_1d(channels, length):
    # Matches positional_encodings.PositionalEncoding1D (interleaved sin/cos).
    ch = int(np.ceil(channels / 2) * 2)
    inv_freq = 1.0 / (10000.0 ** (np.arange(0, ch, 2, dtype=np.float32) / ch))
    pos = np.arange(length, dtype=np.float32)
    sin_inp = np.einsum("i,j->ij", pos, inv_freq)                      # (L, ch/2)
    emb = np.stack((np.sin(sin_inp), np.cos(sin_inp)), axis=-1).reshape(length, ch)
    return emb[:, :channels].astype(np.float32)                        # (L, channels)


def pack_params(p, *, L, num_classes, action_dim, hidden=250):
    f32 = np.float32
    C = num_classes
    S = 2 * L
    F = C * S
    A = action_dim
    H = hidden
    Hp = int(np.ceil(H / 128.0) * 128)            # 250 -> 256
    H2 = 2 * Hp                                   # value half || advantage half
    scale = 1.0 / np.sqrt(C)                      # head_dim == embed_dim (1 head)

    g = lambda k: np.asarray(p[k], dtype=f32)

    # q/k projections; softmax scale folded into Wq/bq
    wq_s, bq_s = g("wq_t") * scale, g("bq") * scale
    wk, bk = g("wk_t"), g("bk")
    # out_proj folded into the v projection (softmax rows sum to 1)
    wvo = g("wv_t") @ g("wo_t")                   # (C, C)
    bvo = g("bv") @ g("wo_t") + g("bo")           # (1, C)

    wf1, bf1 = g("wf1_t"), g("bf1")
    wf2, bf2 = g("wf2_t"), g("bf2")

    # dueling first layers concatenated (value cols 0:H, advantage cols Hp:Hp+H),
    # then rows regrouped by channel: w1_perm[c, l, :] = W1_cat[l*C + c, :]
    w1_cat = np.zeros((F, H2), f32)
    b1_cat = np.zeros((1, H2), f32)
    w1_cat[:, 0:H] = g("wv1_t");       b1_cat[:, 0:H] = g("bv1")
    w1_cat[:, Hp:Hp + H] = g("wa1_t"); b1_cat[:, Hp:Hp + H] = g("ba1")
    w1_perm = np.stack([w1_cat[np.arange(S) * C + c, :] for c in range(C)], axis=0)  # (C,S,H2)

    # dueling head-2 + mean-centering folded into a single (H2, A) weight (exact):
    # q_i = value + adv_i - mean_j(adv_j)
    wv2, bv2 = g("wv2_t"), g("bv2")               # (H, 1), (1, 1)
    wa2, ba2 = g("wa2_t"), g("ba2")               # (H, A), (1, A)
    w2q = np.zeros((H2, A), f32)
    w2q[0:H, :] = np.repeat(wv2, A, axis=1)                        # value rows (same for all i)
    w2q[Hp:Hp + H, :] = wa2 - wa2.mean(axis=1, keepdims=True)      # mean-centered advantage
    b2q = (ba2 - ba2.mean()) + bv2                                 # (1, A)

    # positional encoding for the state||goal token sequence of one batch element
    pe_L = positional_encoding_1d(C, L)                            # (L, C)
    pe = np.concatenate([pe_L, pe_L], axis=0)                      # (S, C)

    arrays = [pe, wq_s, bq_s, wk, bk, wvo, bvo, wf1, bf1, wf2, bf2,
              w1_perm, b1_cat, w2q, b2q]
    arrays = [jnp.asarray(a, dtype=jnp.float32) for a in arrays]
    meta = dict(S=S, C=C, H2=H2, A=A)
    return arrays, meta


# ----------------------------------------------------------------------------
# Pure-JAX reference (same math as the torch module, unpacked weights)
# ----------------------------------------------------------------------------
def _preprocess_ref(state, goal, num_classes):
    B = state.shape[0]
    s_oh = jax.nn.one_hot(state.reshape(B, -1).astype(jnp.int32),
                          num_classes + 1, dtype=jnp.float32)[..., 1:]
    g_oh = jax.nn.one_hot(goal.reshape(B, -1).astype(jnp.int32),
                          num_classes + 1, dtype=jnp.float32)[..., 1:]
    L = s_oh.shape[1]
    pe = jnp.asarray(positional_encoding_1d(num_classes, L))[None]        # (1, L, C)
    return jnp.concatenate([s_oh + pe, g_oh + pe], axis=1)                # (B, 2L, C)


def reference_forward(state, goal, p, num_classes):
    x = _preprocess_ref(state, goal, num_classes)
    scale = 1.0 / np.sqrt(num_classes)
    q = x @ p["wq_t"] + p["bq"]
    k = x @ p["wk_t"] + p["bk"]
    v = x @ p["wv_t"] + p["bv"]
    attn = jax.nn.softmax(jnp.einsum("bqc,bkc->bqk", q * scale, k), axis=-1)
    sa = jnp.einsum("bqk,bkc->bqc", attn, v) @ p["wo_t"] + p["bo"]
    x1 = sa + x
    h = jax.nn.relu(x1 @ p["wf1_t"] + p["bf1"])
    x2 = jax.nn.relu(h @ p["wf2_t"] + p["bf2"]) + x1
    feat = x2.reshape(x2.shape[0], -1)
    value = jax.nn.relu(feat @ p["wv1_t"] + p["bv1"]) @ p["wv2_t"] + p["bv2"]
    adv = jax.nn.relu(feat @ p["wa1_t"] + p["ba1"]) @ p["wa2_t"] + p["ba2"]
    return value + adv - adv.mean(axis=-1, keepdims=True)


# ----------------------------------------------------------------------------
# Deterministic parameter init (synthetic; shapes match the torch module)
# ----------------------------------------------------------------------------
def init_params(key, C, F, H, A):
    def u(k, shape, fan_in):
        b = 1.0 / np.sqrt(fan_in)
        return jax.random.uniform(k, shape, jnp.float32, -b, b)

    ks = jax.random.split(key, 20)
    p = {}
    # MultiheadAttention in_proj split into q/k/v + out_proj (stored transposed: (in, out))
    p["wq_t"], p["bq"] = u(ks[0], (C, C), C), u(ks[1], (1, C), C)
    p["wk_t"], p["bk"] = u(ks[2], (C, C), C), u(ks[3], (1, C), C)
    p["wv_t"], p["bv"] = u(ks[4], (C, C), C), u(ks[5], (1, C), C)
    p["wo_t"], p["bo"] = u(ks[6], (C, C), C), u(ks[7], (1, C), C)
    # AttentionEncoder feed-forward: Linear(C, F), Linear(F, C)
    p["wf1_t"], p["bf1"] = u(ks[8], (C, F), C), u(ks[9], (1, F), C)
    p["wf2_t"], p["bf2"] = u(ks[10], (F, C), F), u(ks[11], (1, C), F)
    # Dueling heads: Linear(F, 250) -> Linear(250, 1 / A)
    p["wv1_t"], p["bv1"] = u(ks[12], (F, H), F), u(ks[13], (1, H), F)
    p["wv2_t"], p["bv2"] = u(ks[14], (H, 1), H), u(ks[15], (1, 1), H)
    p["wa1_t"], p["ba1"] = u(ks[16], (F, H), F), u(ks[17], (1, H), F)
    p["wa2_t"], p["ba2"] = u(ks[18], (H, A), H), u(ks[19], (1, A), H)
    return p


if __name__ == "__main__":
    B = 2
    obs_dim = (4, 4)
    num_classes = 4
    action_dim = 8
    HID = 250                                     # dueling-head hidden dim (torch: 250)

    L = int(np.prod(obs_dim))                     # 16 tokens per stream
    C = num_classes                               # embed dim = 4
    F = num_classes * 2 * L                       # feedforward & flattened feature dim = 128

    key = jax.random.PRNGKey(0)
    k_param, k_state, k_goal = jax.random.split(key, 3)
    params = init_params(k_param, C, F, HID, action_dim)

    # integer boards with values in [0, num_classes]
    state = jax.random.randint(k_state, (B,) + obs_dim, 0, num_classes + 1)
    goal = jax.random.randint(k_goal, (B,) + obs_dim, 0, num_classes + 1)

    packed_arrays, meta = pack_params(params, L=L, num_classes=C,
                                      action_dim=action_dim, hidden=HID)

    q = dueling_dqn_attention_mini_forward(state, goal, packed_arrays, meta)
    q = jax.block_until_ready(q)

    q_ref = reference_forward(state, goal, params, num_classes)
    assert q.shape == (B, action_dim)
    np.testing.assert_allclose(np.asarray(q), np.asarray(q_ref), rtol=2e-2, atol=2e-2)

    print("KERNEL_OK")
</pallas_src>

<mosaic_0001>
module attributes {stable_mosaic.version = 11 : i64} {
  func.func @fused_dqn_kernel(%arg0: i32, %arg1: memref<1x32x1xi32, #tpu.memory_space<vmem>>, %arg2: memref<32x4xf32, #tpu.memory_space<vmem>>, %arg3: memref<4x4xf32, #tpu.memory_space<vmem>>, %arg4: memref<1x4xf32, #tpu.memory_space<vmem>>, %arg5: memref<4x4xf32, #tpu.memory_space<vmem>>, %arg6: memref<1x4xf32, #tpu.memory_space<vmem>>, %arg7: memref<4x4xf32, #tpu.memory_space<vmem>>, %arg8: memref<1x4xf32, #tpu.memory_space<vmem>>, %arg9: memref<4x128xf32, #tpu.memory_space<vmem>>, %arg10: memref<1x128xf32, #tpu.memory_space<vmem>>, %arg11: memref<128x4xf32, #tpu.memory_space<vmem>>, %arg12: memref<1x4xf32, #tpu.memory_space<vmem>>, %arg13: memref<4x32x512xf32, #tpu.memory_space<vmem>>, %arg14: memref<1x512xf32, #tpu.memory_space<vmem>>, %arg15: memref<512x8xf32, #tpu.memory_space<vmem>>, %arg16: memref<1x8xf32, #tpu.memory_space<vmem>>, %arg17: memref<1x1x8xf32, #tpu.memory_space<vmem>>) attributes {dimension_semantics = [#tpu.dimension_semantics<parallel>], iteration_bounds = array<i64: 2>, scalar_prefetch = 0 : i64, scratch_operands = 0 : i64, tpu.core_type = #tpu.core_type<tc>, window_params = [{transform_indices = @transform_0, window_bounds = array<i64: 1, 32, 1>}, {pipeline_mode = #tpu.pipeline_mode<synchronous>, transform_indices = @transform_1, window_bounds = array<i64: 32, 4>}, {pipeline_mode = #tpu.pipeline_mode<synchronous>, transform_indices = @transform_2, window_bounds = array<i64: 4, 4>}, {pipeline_mode = #tpu.pipeline_mode<synchronous>, transform_indices = @transform_3, window_bounds = array<i64: 1, 4>}, {pipeline_mode = #tpu.pipeline_mode<synchronous>, transform_indices = @transform_4, window_bounds = array<i64: 4, 4>}, {pipeline_mode = #tpu.pipeline_mode<synchronous>, transform_indices = @transform_5, window_bounds = array<i64: 1, 4>}, {pipeline_mode = #tpu.pipeline_mode<synchronous>, transform_indices = @transform_6, window_bounds = array<i64: 4, 4>}, {pipeline_mode = #tpu.pipeline_mode<synchronous>, transform_indices = @transform_7, window_bounds = array<i64: 1, 4>}, {pipeline_mode = #tpu.pipeline_mode<synchronous>, transform_indices = @transform_8, window_bounds = array<i64: 4, 128>}, {pipeline_mode = #tpu.pipeline_mode<synchronous>, transform_indices = @transform_9, window_bounds = array<i64: 1, 128>}, {pipeline_mode = #tpu.pipeline_mode<synchronous>, transform_indices = @transform_10, window_bounds = array<i64: 128, 4>}, {pipeline_mode = #tpu.pipeline_mode<synchronous>, transform_indices = @transform_11, window_bounds = array<i64: 1, 4>}, {pipeline_mode = #tpu.pipeline_mode<synchronous>, transform_indices = @transform_12, window_bounds = array<i64: 4, 32, 512>}, {pipeline_mode = #tpu.pipeline_mode<synchronous>, transform_indices = @transform_13, window_bounds = array<i64: 1, 512>}, {pipeline_mode = #tpu.pipeline_mode<synchronous>, transform_indices = @transform_14, window_bounds = array<i64: 512, 8>}, {pipeline_mode = #tpu.pipeline_mode<synchronous>, transform_indices = @transform_15, window_bounds = array<i64: 1, 8>}, {transform_indices = @transform_16, window_bounds = array<i64: 1, 1, 8>}]} {
    %c0 = arith.constant 0 : index
    %c0_0 = arith.constant 0 : index
    %c0_1 = arith.constant 0 : index
    %0 = vector.load %arg1[%c0, %c0_0, %c0_1] : memref<1x32x1xi32, #tpu.memory_space<vmem>>, vector<1x32x1xi32>
    %1 = vector.shape_cast %0 : vector<1x32x1xi32> to vector<32x1xi32>
    %2 = tpu.iota {dimensions = array<i32: 1>} : vector<32x4xi32>
    %c1_i32 = arith.constant 1 : i32
    %3 = vector.broadcast %c1_i32 : i32 to vector<32x4xi32>
    %4 = arith.addi %2, %3 : vector<32x4xi32>
    %5 = vector.broadcast %1 : vector<32x1xi32> to vector<32x4xi32>
    %6 = arith.cmpi eq, %5, %4 : vector<32x4xi32>
    %cst = arith.constant 1.000000e+00 : f32
    %cst_2 = arith.constant 0.000000e+00 : f32
    %7 = vector.broadcast %cst : f32 to vector<32x4xf32>
    %8 = vector.broadcast %cst_2 : f32 to vector<32x4xf32>
    %9 = arith.select %6, %7, %8 : vector<32x4xi1>, vector<32x4xf32>
    %c0_3 = arith.constant 0 : index
    %c0_4 = arith.constant 0 : index
    %10 = vector.load %arg2[%c0_3, %c0_4] : memref<32x4xf32, #tpu.memory_space<vmem>>, vector<32x4xf32>
    %11 = arith.addf %9, %10 : vector<32x4xf32>
    %c0_5 = arith.constant 0 : index
    %c0_6 = arith.constant 0 : index
    %12 = vector.load %arg3[%c0_5, %c0_6] : memref<4x4xf32, #tpu.memory_space<vmem>>, vector<4x4xf32>
    %cst_7 = arith.constant dense<0.000000e+00> : vector<32x4xf32>
    %13 = tpu.matmul %11, %12, %cst_7 {dimension_numbers = #tpu.dot_dimension_numbers<[1], [0], [0], [1], [0, 0, 1, 1], [], []>} : vector<32x4xf32>, vector<4x4xf32>, vector<32x4xf32> -> vector<32x4xf32>
    %c0_8 = arith.constant 0 : index
    %c0_9 = arith.constant 0 : index
    %14 = vector.load %arg4[%c0_8, %c0_9] : memref<1x4xf32, #tpu.memory_space<vmem>>, vector<1x4xf32>
    %15 = vector.broadcast %14 : vector<1x4xf32> to vector<32x4xf32>
    %16 = arith.addf %13, %15 : vector<32x4xf32>
    %c0_10 = arith.constant 0 : index
    %c0_11 = arith.constant 0 : index
    %17 = vector.load %arg5[%c0_10, %c0_11] : memref<4x4xf32, #tpu.memory_space<vmem>>, vector<4x4xf32>
    %cst_12 = arith.constant dense<0.000000e+00> : vector<32x4xf32>
    %18 = tpu.matmul %11, %17, %cst_12 {dimension_numbers = #tpu.dot_dimension_numbers<[1], [0], [0], [1], [0, 0, 1, 1], [], []>} : vector<32x4xf32>, vector<4x4xf32>, vector<32x4xf32> -> vector<32x4xf32>
    %c0_13 = arith.constant 0 : index
    %c0_14 = arith.constant 0 : index
    %19 = vector.load %arg6[%c0_13, %c0_14] : memref<1x4xf32, #tpu.memory_space<vmem>>, vector<1x4xf32>
    %20 = vector.broadcast %19 : vector<1x4xf32> to vector<32x4xf32>
    %21 = arith.addf %18, %20 : vector<32x4xf32>
    %c0_15 = arith.constant 0 : index
    %c0_16 = arith.constant 0 : index
    %22 = vector.load %arg7[%c0_15, %c0_16] : memref<4x4xf32, #tpu.memory_space<vmem>>, vector<4x4xf32>
    %cst_17 = arith.constant dense<0.000000e+00> : vector<32x4xf32>
    %23 = tpu.matmul %11, %22, %cst_17 {dimension_numbers = #tpu.dot_dimension_numbers<[1], [0], [0], [1], [0, 0, 1, 1], [], []>} : vector<32x4xf32>, vector<4x4xf32>, vector<32x4xf32> -> vector<32x4xf32>
    %cst_18 = arith.constant dense<0.000000e+00> : vector<32x32xf32>
    %24 = tpu.matmul %16, %21, %cst_18 {dimension_numbers = #tpu.dot_dimension_numbers<[1], [1], [0], [0], [0, 0, 1, 0], [], []>} : vector<32x4xf32>, vector<32x4xf32>, vector<32x32xf32> -> vector<32x32xf32>
    %cst_19 = arith.constant dense<0xFF800000> : vector<32xf32>
    %25 = vector.multi_reduction <maximumf>, %24, %cst_19 [1] : vector<32x32xf32> to vector<32xf32>
    %26 = vector.shape_cast %25 : vector<32xf32> to vector<32x1xf32>
    %27 = vector.broadcast %26 : vector<32x1xf32> to vector<32x32xf32>
    %28 = arith.subf %24, %27 : vector<32x32xf32>
    %29 = math.exp %28 : vector<32x32xf32>
    %cst_20 = arith.constant dense<0.000000e+00> : vector<32xf32>
    %30 = vector.multi_reduction <add>, %29, %cst_20 [1] : vector<32x32xf32> to vector<32xf32>
    %31 = vector.shape_cast %30 : vector<32xf32> to vector<32x1xf32>
    %32 = tpu.reciprocal %31 {approx = true} : vector<32x1xf32> -> vector<32x1xf32>
    %33 = vector.broadcast %32 : vector<32x1xf32> to vector<32x32xf32>
    %34 = arith.mulf %29, %33 : vector<32x32xf32>
    %cst_21 = arith.constant dense<0.000000e+00> : vector<32x4xf32>
    %35 = tpu.matmul %34, %23, %cst_21 {dimension_numbers = #tpu.dot_dimension_numbers<[1], [0], [0], [1], [0, 0, 1, 1], [], []>} : vector<32x32xf32>, vector<32x4xf32>, vector<32x4xf32> -> vector<32x4xf32>
    %c0_22 = arith.constant 0 : index
    %c0_23 = arith.constant 0 : index
    %36 = vector.load %arg8[%c0_22, %c0_23] : memref<1x4xf32, #tpu.memory_space<vmem>>, vector<1x4xf32>
    %37 = vector.broadcast %36 : vector<1x4xf32> to vector<32x4xf32>
    %38 = arith.addf %35, %37 : vector<32x4xf32>
    %39 = arith.addf %38, %11 : vector<32x4xf32>
    %c0_24 = arith.constant 0 : index
    %c0_25 = arith.constant 0 : index
    %40 = vector.load %arg9[%c0_24, %c0_25] : memref<4x128xf32, #tpu.memory_space<vmem>>, vector<4x128xf32>
    %cst_26 = arith.constant dense<0.000000e+00> : vector<32x128xf32>
    %41 = tpu.matmul %39, %40, %cst_26 {dimension_numbers = #tpu.dot_dimension_numbers<[1], [0], [0], [1], [0, 0, 1, 1], [], []>} : vector<32x4xf32>, vector<4x128xf32>, vector<32x128xf32> -> vector<32x128xf32>
    %c0_27 = arith.constant 0 : index
    %c0_28 = arith.constant 0 : index
    %42 = vector.load %arg10[%c0_27, %c0_28] : memref<1x128xf32, #tpu.memory_space<vmem>>, vector<1x128xf32>
    %43 = vector.broadcast %42 : vector<1x128xf32> to vector<32x128xf32>
    %44 = arith.addf %41, %43 : vector<32x128xf32>
    %cst_29 = arith.constant 0.000000e+00 : f32
    %45 = vector.broadcast %cst_29 : f32 to vector<32x128xf32>
    %46 = arith.maximumf %44, %45 : vector<32x128xf32>
    %c0_30 = arith.constant 0 : index
    %c0_31 = arith.constant 0 : index
    %47 = vector.load %arg11[%c0_30, %c0_31] : memref<128x4xf32, #tpu.memory_space<vmem>>, vector<128x4xf32>
    %cst_32 = arith.constant dense<0.000000e+00> : vector<32x4xf32>
    %48 = tpu.matmul %46, %47, %cst_32 {dimension_numbers = #tpu.dot_dimension_numbers<[1], [0], [0], [1], [0, 0, 1, 1], [], []>} : vector<32x128xf32>, vector<128x4xf32>, vector<32x4xf32> -> vector<32x4xf32>
    %c0_33 = arith.constant 0 : index
    %c0_34 = arith.constant 0 : index
    %49 = vector.load %arg12[%c0_33, %c0_34] : memref<1x4xf32, #tpu.memory_space<vmem>>, vector<1x4xf32>
    %50 = vector.broadcast %49 : vector<1x4xf32> to vector<32x4xf32>
    %51 = arith.addf %48, %50 : vector<32x4xf32>
    %cst_35 = arith.constant 0.000000e+00 : f32
    %52 = vector.broadcast %cst_35 : f32 to vector<32x4xf32>
    %53 = arith.maximumf %51, %52 : vector<32x4xf32>
    %54 = arith.addf %53, %39 : vector<32x4xf32>
    %55 = vector.extract_strided_slice %54 {offsets = [0, 0], sizes = [32, 1], strides = [1, 1]} : vector<32x4xf32> to vector<32x1xf32>
    %c0_36 = arith.constant 0 : index
    %c0_37 = arith.constant 0 : index
    %c0_38 = arith.constant 0 : index
    %56 = vector.load %arg13[%c0_36, %c0_37, %c0_38] : memref<4x32x512xf32, #tpu.memory_space<vmem>>, vector<1x32x512xf32>
    %57 = vector.shape_cast %56 : vector<1x32x512xf32> to vector<32x512xf32>
    %58 = vector.broadcast %55 : vector<32x1xf32> to vector<32x512xf32>
    %59 = arith.mulf %58, %57 : vector<32x512xf32>
    %60 = vector.extract_strided_slice %54 {offsets = [0, 1], sizes = [32, 1], strides = [1, 1]} : vector<32x4xf32> to vector<32x1xf32>
    %c1 = arith.constant 1 : index
    %c0_39 = arith.constant 0 : index
    %c0_40 = arith.constant 0 : index
    %61 = vector.load %arg13[%c1, %c0_39, %c0_40] : memref<4x32x512xf32, #tpu.memory_space<vmem>>, vector<1x32x512xf32>
    %62 = vector.shape_cast %61 : vector<1x32x512xf32> to vector<32x512xf32>
    %63 = vector.broadcast %60 : vector<32x1xf32> to vector<32x512xf32>
    %64 = arith.mulf %63, %62 : vector<32x512xf32>
    %65 = arith.addf %59, %64 : vector<32x512xf32>
    %66 = vector.extract_strided_slice %54 {offsets = [0, 2], sizes = [32, 1], strides = [1, 1]} : vector<32x4xf32> to vector<32x1xf32>
    %c2 = arith.constant 2 : index
    %c0_41 = arith.constant 0 : index
    %c0_42 = arith.constant 0 : index
    %67 = vector.load %arg13[%c2, %c0_41, %c0_42] : memref<4x32x512xf32, #tpu.memory_space<vmem>>, vector<1x32x512xf32>
    %68 = vector.shape_cast %67 : vector<1x32x512xf32> to vector<32x512xf32>
    %69 = vector.broadcast %66 : vector<32x1xf32> to vector<32x512xf32>
    %70 = arith.mulf %69, %68 : vector<32x512xf32>
    %71 = arith.addf %65, %70 : vector<32x512xf32>
    %72 = vector.extract_strided_slice %54 {offsets = [0, 3], sizes = [32, 1], strides = [1, 1]} : vector<32x4xf32> to vector<32x1xf32>
    %c3 = arith.constant 3 : index
    %c0_43 = arith.constant 0 : index
    %c0_44 = arith.constant 0 : index
    %73 = vector.load %arg13[%c3, %c0_43, %c0_44] : memref<4x32x512xf32, #tpu.memory_space<vmem>>, vector<1x32x512xf32>
    %74 = vector.shape_cast %73 : vector<1x32x512xf32> to vector<32x512xf32>
    %75 = vector.broadcast %72 : vector<32x1xf32> to vector<32x512xf32>
    %76 = arith.mulf %75, %74 : vector<32x512xf32>
    %77 = arith.addf %71, %76 : vector<32x512xf32>
    %cst_45 = arith.constant dense<0.000000e+00> : vector<512xf32>
    %78 = vector.multi_reduction <add>, %77, %cst_45 [0] : vector<32x512xf32> to vector<512xf32>
    %79 = vector.shape_cast %78 : vector<512xf32> to vector<1x512xf32>
    %c0_46 = arith.constant 0 : index
    %c0_47 = arith.constant 0 : index
    %80 = vector.load %arg14[%c0_46, %c0_47] : memref<1x512xf32, #tpu.memory_space<vmem>>, vector<1x512xf32>
    %81 = arith.addf %79, %80 : vector<1x512xf32>
    %cst_48 = arith.constant 0.000000e+00 : f32
    %82 = vector.broadcast %cst_48 : f32 to vector<1x512xf32>
    %83 = arith.maximumf %81, %82 : vector<1x512xf32>
    %c0_49 = arith.constant 0 : index
    %c0_50 = arith.constant 0 : index
    %84 = vector.load %arg15[%c0_49, %c0_50] : memref<512x8xf32, #tpu.memory_space<vmem>>, vector<512x8xf32>
    %cst_51 = arith.constant dense<0.000000e+00> : vector<1x8xf32>
    %85 = tpu.matmul %83, %84, %cst_51 {dimension_numbers = #tpu.dot_dimension_numbers<[1], [0], [0], [1], [0, 0, 1, 1], [], []>} : vector<1x512xf32>, vector<512x8xf32>, vector<1x8xf32> -> vector<1x8xf32>
    %c0_52 = arith.constant 0 : index
    %c0_53 = arith.constant 0 : index
    %86 = vector.load %arg16[%c0_52, %c0_53] : memref<1x8xf32, #tpu.memory_space<vmem>>, vector<1x8xf32>
    %87 = arith.addf %85, %86 : vector<1x8xf32>
    %c0_54 = arith.constant 0 : index
    %c0_55 = arith.constant 0 : index
    %c0_56 = arith.constant 0 : index
    %88 = vector.load %arg17[%c0_54, %c0_55, %c0_56] : memref<1x1x8xf32, #tpu.memory_space<vmem>>, vector<1x1x8xf32>
    %89 = vector.shape_cast %88 : vector<1x1x8xf32> to vector<1x8xf32>
    %90 = vector.shape_cast %87 : vector<1x8xf32> to vector<1x1x8xf32>
    tpu.vector_store %arg17[%c0_54, %c0_55, %c0_56], %90 {strides = array<i32>} : memref<1x1x8xf32, #tpu.memory_space<vmem>>, vector<1x1x8xf32>,
    return
  }
  func.func @transform_0(%arg0: i32) -> (i32, i32, i32) {
    %c0_i32 = arith.constant 0 : i32
    %c0_i32_0 = arith.constant 0 : i32
    %c0_i32_1 = arith.constant 0 : i32
    return %arg0, %c0_i32, %c0_i32_0 : i32, i32, i32
  }
  func.func @transform_1(%arg0: i32) -> (i32, i32) {
    %c0_i32 = arith.constant 0 : i32
    %c0_i32_0 = arith.constant 0 : i32
    %c0_i32_1 = arith.constant 0 : i32
    return %c0_i32, %c0_i32_0 : i32, i32
  }
  func.func @transform_2(%arg0: i32) -> (i32, i32) {
    %c0_i32 = arith.constant 0 : i32
    %c0_i32_0 = arith.constant 0 : i32
    %c0_i32_1 = arith.constant 0 : i32
    return %c0_i32, %c0_i32_0 : i32, i32
  }
  func.func @transform_3(%arg0: i32) -> (i32, i32) {
    %c0_i32 = arith.constant 0 : i32
    %c0_i32_0 = arith.constant 0 : i32
    %c0_i32_1 = arith.constant 0 : i32
    return %c0_i32, %c0_i32_0 : i32, i32
  }
  func.func @transform_4(%arg0: i32) -> (i32, i32) {
    %c0_i32 = arith.constant 0 : i32
    %c0_i32_0 = arith.constant 0 : i32
    %c0_i32_1 = arith.constant 0 : i32
    return %c0_i32, %c0_i32_0 : i32, i32
  }
  func.func @transform_5(%arg0: i32) -> (i32, i32) {
    %c0_i32 = arith.constant 0 : i32
    %c0_i32_0 = arith.constant 0 : i32
    %c0_i32_1 = arith.constant 0 : i32
    return %c0_i32, %c0_i32_0 : i32, i32
  }
  func.func @transform_6(%arg0: i32) -> (i32, i32) {
    %c0_i32 = arith.constant 0 : i32
    %c0_i32_0 = arith.constant 0 : i32
    %c0_i32_1 = arith.constant 0 : i32
    return %c0_i32, %c0_i32_0 : i32, i32
  }
  func.func @transform_7(%arg0: i32) -> (i32, i32) {
    %c0_i32 = arith.constant 0 : i32
    %c0_i32_0 = arith.constant 0 : i32
    %c0_i32_1 = arith.constant 0 : i32
    return %c0_i32, %c0_i32_0 : i32, i32
  }
  func.func @transform_8(%arg0: i32) -> (i32, i32) {
    %c0_i32 = arith.constant 0 : i32
    %c0_i32_0 = arith.constant 0 : i32
    %c0_i32_1 = arith.constant 0 : i32
    return %c0_i32, %c0_i32_0 : i32, i32
  }
  func.func @transform_9(%arg0: i32) -> (i32, i32) {
    %c0_i32 = arith.constant 0 : i32
    %c0_i32_0 = arith.constant 0 : i32
    %c0_i32_1 = arith.constant 0 : i32
    return %c0_i32, %c0_i32_0 : i32, i32
  }
  func.func @transform_10(%arg0: i32) -> (i32, i32) {
    %c0_i32 = arith.constant 0 : i32
    %c0_i32_0 = arith.constant 0 : i32
    %c0_i32_1 = arith.constant 0 : i32
    return %c0_i32, %c0_i32_0 : i32, i32
  }
  func.func @transform_11(%arg0: i32) -> (i32, i32) {
    %c0_i32 = arith.constant 0 : i32
    %c0_i32_0 = arith.constant 0 : i32
    %c0_i32_1 = arith.constant 0 : i32
    return %c0_i32, %c0_i32_0 : i32, i32
  }
  func.func @transform_12(%arg0: i32) -> (i32, i32, i32) {
    %c0_i32 = arith.constant 0 : i32
    %c0_i32_0 = arith.constant 0 : i32
    %c0_i32_1 = arith.constant 0 : i32
    %c0_i32_2 = arith.constant 0 : i32
    return %c0_i32, %c0_i32_0, %c0_i32_1 : i32, i32, i32
  }
  func.func @transform_13(%arg0: i32) -> (i32, i32) {
    %c0_i32 = arith.constant 0 : i32
    %c0_i32_0 = arith.constant 0 : i32
    %c0_i32_1 = arith.constant 0 : i32
    return %c0_i32, %c0_i32_0 : i32, i32
  }
  func.func @transform_14(%arg0: i32) -> (i32, i32) {
    %c0_i32 = arith.constant 0 : i32
    %c0_i32_0 = arith.constant 0 : i32
    %c0_i32_1 = arith.constant 0 : i32
    return %c0_i32, %c0_i32_0 : i32, i32
  }
  func.func @transform_15(%arg0: i32) -> (i32, i32) {
    %c0_i32 = arith.constant 0 : i32
    %c0_i32_0 = arith.constant 0 : i32
    %c0_i32_1 = arith.constant 0 : i32
    return %c0_i32, %c0_i32_0 : i32, i32
  }
  func.func @transform_16(%arg0: i32) -> (i32, i32, i32) {
    %c0_i32 = arith.constant 0 : i32
    %c0_i32_0 = arith.constant 0 : i32
    %c0_i32_1 = arith.constant 0 : i32
    return %arg0, %c0_i32, %c0_i32_0 : i32, i32, i32
  }
}

</mosaic_0001>

<llo_original>
// kernel: tpu_custom_call.1
$region0: #{tpu_custom_call.1}
  #allocation0 [shape = 'u32[]', space=smem, size = 0x4, offset = 0x4, fixed_abs, tag = 'smem constant byte address 0x4 - core index']
  #allocation1 [shape = 'u32[72,128]{1,0:T(1,128)}', space=vmem, size = 0x9000, scoped, tag = 'internal scratch']
  %s0 = inlined_call_operand.vmem [shape: s32[2,32,1], index: 0, kind: input, shape index: {}]
  %s1 = inlined_call_operand.vmem [shape: f32[32,4], index: 1, kind: input, shape index: {}]
  %s2 = inlined_call_operand.vmem [shape: f32[4,4], index: 2, kind: input, shape index: {}]
  %s3 = inlined_call_operand.vmem [shape: f32[1,4], index: 3, kind: input, shape index: {}]
  %s4 = inlined_call_operand.vmem [shape: f32[4,4], index: 4, kind: input, shape index: {}]
  %s5 = inlined_call_operand.vmem [shape: f32[1,4], index: 5, kind: input, shape index: {}]
  %s6 = inlined_call_operand.vmem [shape: f32[4,4], index: 6, kind: input, shape index: {}]
  %s7 = inlined_call_operand.vmem [shape: f32[1,4], index: 7, kind: input, shape index: {}]
  %s8 = inlined_call_operand.vmem [shape: f32[4,128], index: 8, kind: input, shape index: {}]
  %s9 = inlined_call_operand.vmem [shape: f32[1,128], index: 9, kind: input, shape index: {}]
  %s10 = inlined_call_operand.vmem [shape: f32[128,4], index: 10, kind: input, shape index: {}]
  %s11 = inlined_call_operand.vmem [shape: f32[1,4], index: 11, kind: input, shape index: {}]
  %s12 = inlined_call_operand.vmem [shape: f32[4,32,512], index: 12, kind: input, shape index: {}]
  %s13 = inlined_call_operand.vmem [shape: f32[1,512], index: 13, kind: input, shape index: {}]
  %s14 = inlined_call_operand.vmem [shape: f32[512,8], index: 14, kind: input, shape index: {}]
  %s15 = inlined_call_operand.vmem [shape: f32[1,8], index: 15, kind: input, shape index: {}]
  %s16 = inlined_call_operand.hbm [shape: f32[2,1,8], index: 16, kind: output, shape index: {}]
  %s17 = sld [smem:[#allocation0]]
  $region97: #{tpu_custom_call.1} parent=0
    _
  %s19 = ssub.s32 1, %s17
  %s20 = scalar_select 0, %s19, %s17
  $region1: #{tpu_custom_call.1} parent=0
    #allocation2 [shape = 'u8[1024]{0}', space=vmem, size = 0x400, scoped, tag = 'output window, operand 0']
    #allocation3 [shape = 's32[2]{0}', space=sflag, size = 0x8, scoped, tag = 'scoped memory for tpu_custom_call.1']
    %21 = vsyncpa [#allocation3], 0
    %s22 = scalar_lea.sflag [#allocation3], 1
    %23 = vsyncpa %s22, 0
    loop: start=0, step=1, limit=4
    $region2: #{tpu_custom_call.1} parent=1 // loop_pre_header
      _
    $region3: #{tpu_custom_call.1} parent=1 // loop_header
      %s25 = sphi 0, %s29
      %p26 = scmp.ge.s32.totalorder %s25, 4
      %s35 = sphi 0, %s37
      %s38 = sphi 0, %s35
      %s39 = sphi 0, %s38
      %s55 = sphi 0, %s39
      %s59 = sphi 0, %s59
      %s61 = sphi 0, %s59
      %s62 = sphi 0, %s61
      %s76 = sphi 0, %s62
      %s80 = sphi 0, %s80
      %s82 = sphi 0, %s80
      %s83 = sphi 0, %s82
      %s97 = sphi 0, %s83
      %s101 = sphi 0, %s101
      %s103 = sphi 0, %s101
      %s104 = sphi 0, %s103
      %s118 = sphi 0, %s104
      %s122 = sphi 0, %s122
      %s124 = sphi 0, %s122
      %s125 = sphi 0, %s124
      %s139 = sphi 0, %s125
      %s143 = sphi 0, %s143
      %s145 = sphi 0, %s143
      %s146 = sphi 0, %s145
      %s160 = sphi 0, %s146
      %s164 = sphi 0, %s164
      %s166 = sphi 0, %s164
      %s167 = sphi 0, %s166
      %s181 = sphi 0, %s167
      %s185 = sphi 0, %s185
      %s187 = sphi 0, %s185
      %s188 = sphi 0, %s187
      %s202 = sphi 0, %s188
      %s206 = sphi 0, %s206
      %s208 = sphi 0, %s206
      %s209 = sphi 0, %s208
      %s223 = sphi 0, %s209
      %s227 = sphi 0, %s227
      %s229 = sphi 0, %s227
      %s230 = sphi 0, %s229
      %s244 = sphi 0, %s230
      %s248 = sphi 0, %s248
      %s250 = sphi 0, %s248
      %s251 = sphi 0, %s250
      %s265 = sphi 0, %s251
      %s269 = sphi 0, %s269
      %s271 = sphi 0, %s269
      %s272 = sphi 0, %s271
      %s286 = sphi 0, %s272
      %s290 = sphi 0, %s290
      %s292 = sphi 0, %s290
      %s293 = sphi 0, %s292
      %s307 = sphi 0, %s293
      %s311 = sphi 0, %s311
      %s313 = sphi 0, %s311
      %s314 = sphi 0, %s313
      %s328 = sphi 0, %s314
      %s332 = sphi 0, %s332
      %s334 = sphi 0, %s332
      %s335 = sphi 0, %s334
      %s349 = sphi 0, %s335
      %s353 = sphi 0, %s353
      %s355 = sphi 0, %s353
      %s356 = sphi 0, %s355
      %s370 = sphi 0, %s356
      %s376 = sphi 0, %s378
      %s379 = sphi 0, %s376
      %s380 = sphi 0, %s379
      %s396 = sphi 0, %s380
    $region4: #{tpu_custom_call.1} parent=1 // loop_header_branch
      %28 = sbr.rel (%p26) target = $region8
    $region5: #{tpu_custom_call.1} parent=1 // loop_body
      %s30 = ssub.s32 %s25, 1
      %s31 = ssub.s32 %s25, 2
      %s32 = sadd.s32 %s25, 1
      %s33 = ssub.s32 %s25, %s32
      %p34 = scmp.eq.s32.totalorder %s33, 0
      %s36 = sadd.s32 %s35, 1
      %s37 = scalar_select %p34, %s35, %s36
      %p40 = pneg %p34
      %p41 = scmp.eq.s32.totalorder %s25, 1
      %p42 = por %p40, %p41
      %p43 = scmp.ne.s32.totalorder %s35, %s38
      %p44 = scmp.eq.s32.totalorder %s25, 0
      %p45 = por %p43, %p44
      %p46 = scmp.ne.s32.totalorder %s35, %s38
      %p47 = scmp.eq.s32.totalorder %s30, 1
      %p48 = por %p46, %p47
      %p49 = scmp.ne.s32.totalorder %s38, %s39
      %p50 = scmp.eq.s32.totalorder %s30, 0
      %p51 = por %p49, %p50
      %p52 = scmp.ne.s32.totalorder %s38, %s39
      %p53 = scmp.eq.s32.totalorder %s31, 1
      %p54 = por %p52, %p53
      %p56 = scmp.ne.s32.totalorder %s39, %s55
      %p57 = scmp.eq.s32.totalorder %s31, 0
      %p58 = por %p56, %p57
      %s60 = sadd.s32 %s59, 1
      %p63 = scmp.eq.s32.totalorder %s25, 1
      %p64 = scmp.ne.s32.totalorder %s59, %s61
      %p65 = scmp.eq.s32.totalorder %s25, 0
      %p66 = por %p64, %p65
      %p67 = scmp.ne.s32.totalorder %s59, %s61
      %p68 = scmp.eq.s32.totalorder %s30, 1
      %p69 = por %p67, %p68
      %p70 = scmp.ne.s32.totalorder %s61, %s62
      %p71 = scmp.eq.s32.totalorder %s30, 0
      %p72 = por %p70, %p71
      %p73 = scmp.ne.s32.totalorder %s61, %s62
      %p74 = scmp.eq.s32.totalorder %s31, 1
      %p75 = por %p73, %p74
      %p77 = scmp.ne.s32.totalorder %s62, %s76
      %p78 = scmp.eq.s32.totalorder %s31, 0
      %p79 = por %p77, %p78
      %s81 = sadd.s32 %s80, 1
      %p84 = scmp.eq.s32.totalorder %s25, 1
      %p85 = scmp.ne.s32.totalorder %s80, %s82
      %p86 = scmp.eq.s32.totalorder %s25, 0
      %p87 = por %p85, %p86
      %p88 = scmp.ne.s32.totalorder %s80, %s82
      %p89 = scmp.eq.s32.totalorder %s30, 1
      %p90 = por %p88, %p89
      %p91 = scmp.ne.s32.totalorder %s82, %s83
      %p92 = scmp.eq.s32.totalorder %s30, 0
      %p93 = por %p91, %p92
      %p94 = scmp.ne.s32.totalorder %s82, %s83
      %p95 = scmp.eq.s32.totalorder %s31, 1
      %p96 = por %p94, %p95
      %p98 = scmp.ne.s32.totalorder %s83, %s97
      %p99 = scmp.eq.s32.totalorder %s31, 0
      %p100 = por %p98, %p99
      %s102 = sadd.s32 %s101, 1
      %p105 = scmp.eq.s32.totalorder %s25, 1
      %p106 = scmp.ne.s32.totalorder %s101, %s103
      %p107 = scmp.eq.s32.totalorder %s25, 0
      %p108 = por %p106, %p107
      %p109 = scmp.ne.s32.totalorder %s101, %s103
      %p110 = scmp.eq.s32.totalorder %s30, 1
      %p111 = por %p109, %p110
      %p112 = scmp.ne.s32.totalorder %s103, %s104
      %p113 = scmp.eq.s32.totalorder %s30, 0
      %p114 = por %p112, %p113
      %p115 = scmp.ne.s32.totalorder %s103, %s104
      %p116 = scmp.eq.s32.totalorder %s31, 1
      %p117 = por %p115, %p116
      %p119 = scmp.ne.s32.totalorder %s104, %s118
      %p120 = scmp.eq.s32.totalorder %s31, 0
      %p121 = por %p119, %p120
      %s123 = sadd.s32 %s122, 1
      %p126 = scmp.eq.s32.totalorder %s25, 1
      %p127 = scmp.ne.s32.totalorder %s122, %s124
      %p128 = scmp.eq.s32.totalorder %s25, 0
      %p129 = por %p127, %p128
      %p130 = scmp.ne.s32.totalorder %s122, %s124
      %p131 = scmp.eq.s32.totalorder %s30, 1
      %p132 = por %p130, %p131
      %p133 = scmp.ne.s32.totalorder %s124, %s125
      %p134 = scmp.eq.s32.totalorder %s30, 0
      %p135 = por %p133, %p134
      %p136 = scmp.ne.s32.totalorder %s124, %s125
      %p137 = scmp.eq.s32.totalorder %s31, 1
      %p138 = por %p136, %p137
      %p140 = scmp.ne.s32.totalorder %s125, %s139
      %p141 = scmp.eq.s32.totalorder %s31, 0
      %p142 = por %p140, %p141
      %s144 = sadd.s32 %s143, 1
      %p147 = scmp.eq.s32.totalorder %s25, 1
      %p148 = scmp.ne.s32.totalorder %s143, %s145
      %p149 = scmp.eq.s32.totalorder %s25, 0
      %p150 = por %p148, %p149
      %p151 = scmp.ne.s32.totalorder %s143, %s145
      %p152 = scmp.eq.s32.totalorder %s30, 1
      %p153 = por %p151, %p152
      %p154 = scmp.ne.s32.totalorder %s145, %s146
      %p155 = scmp.eq.s32.totalorder %s30, 0
      %p156 = por %p154, %p155
      %p157 = scmp.ne.s32.totalorder %s145, %s146
      %p158 = scmp.eq.s32.totalorder %s31, 1
      %p159 = por %p157, %p158
      %p161 = scmp.ne.s32.totalorder %s146, %s160
      %p162 = scmp.eq.s32.totalorder %s31, 0
      %p163 = por %p161, %p162
      %s165 = sadd.s32 %s164, 1
      %p168 = scmp.eq.s32.totalorder %s25, 1
      %p169 = scmp.ne.s32.totalorder %s164, %s166
      %p170 = scmp.eq.s32.totalorder %s25, 0
      %p171 = por %p169, %p170
      %p172 = scmp.ne.s32.totalorder %s164, %s166
      %p173 = scmp.eq.s32.totalorder %s30, 1
      %p174 = por %p172, %p173
      %p175 = scmp.ne.s32.totalorder %s166, %s167
      %p176 = scmp.eq.s32.totalorder %s30, 0
      %p177 = por %p175, %p176
      %p178 = scmp.ne.s32.totalorder %s166, %s167
      %p179 = scmp.eq.s32.totalorder %s31, 1
      %p180 = por %p178, %p179
      %p182 = scmp.ne.s32.totalorder %s167, %s181
      %p183 = scmp.eq.s32.totalorder %s31, 0
      %p184 = por %p182, %p183
      %s186 = sadd.s32 %s185, 1
      %p189 = scmp.eq.s32.totalorder %s25, 1
      %p190 = scmp.ne.s32.totalorder %s185, %s187
      %p191 = scmp.eq.s32.totalorder %s25, 0
      %p192 = por %p190, %p191
      %p193 = scmp.ne.s32.totalorder %s185, %s187
      %p194 = scmp.eq.s32.totalorder %s30, 1
      %p195 = por %p193, %p194
      %p196 = scmp.ne.s32.totalorder %s187, %s188
      %p197 = scmp.eq.s32.totalorder %s30, 0
      %p198 = por %p196, %p197
      %p199 = scmp.ne.s32.totalorder %s187, %s188
      %p200 = scmp.eq.s32.totalorder %s31, 1
      %p201 = por %p199, %p200
      %p203 = scmp.ne.s32.totalorder %s188, %s202
      %p204 = scmp.eq.s32.totalorder %s31, 0
      %p205 = por %p203, %p204
      %s207 = sadd.s32 %s206, 1
      %p210 = scmp.eq.s32.totalorder %s25, 1
      %p211 = scmp.ne.s32.totalorder %s206, %s208
      %p212 = scmp.eq.s32.totalorder %s25, 0
      %p213 = por %p211, %p212
      %p214 = scmp.ne.s32.totalorder %s206, %s208
      %p215 = scmp.eq.s32.totalorder %s30, 1
      %p216 = por %p214, %p215
      %p217 = scmp.ne.s32.totalorder %s208, %s209
      %p218 = scmp.eq.s32.totalorder %s30, 0
      %p219 = por %p217, %p218
      %p220 = scmp.ne.s32.totalorder %s208, %s209
      %p221 = scmp.eq.s32.totalorder %s31, 1
      %p222 = por %p220, %p221
      %p224 = scmp.ne.s32.totalorder %s209, %s223
      %p225 = scmp.eq.s32.totalorder %s31, 0
      %p226 = por %p224, %p225
      %s228 = sadd.s32 %s227, 1
      %p231 = scmp.eq.s32.totalorder %s25, 1
      %p232 = scmp.ne.s32.totalorder %s227, %s229
      %p233 = scmp.eq.s32.totalorder %s25, 0
      %p234 = por %p232, %p233
      %p235 = scmp.ne.s32.totalorder %s227, %s229
      %p236 = scmp.eq.s32.totalorder %s30, 1
      %p237 = por %p235, %p236
      %p238 = scmp.ne.s32.totalorder %s229, %s230
      %p239 = scmp.eq.s32.totalorder %s30, 0
      %p240 = por %p238, %p239
      %p241 = scmp.ne.s32.totalorder %s229, %s230
      %p242 = scmp.eq.s32.totalorder %s31, 1
      %p243 = por %p241, %p242
      %p245 = scmp.ne.s32.totalorder %s230, %s244
      %p246 = scmp.eq.s32.totalorder %s31, 0
      %p247 = por %p245, %p246
      %s249 = sadd.s32 %s248, 1
      %p252 = scmp.eq.s32.totalorder %s25, 1
      %p253 = scmp.ne.s32.totalorder %s248, %s250
      %p254 = scmp.eq.s32.totalorder %s25, 0
      %p255 = por %p253, %p254
      %p256 = scmp.ne.s32.totalorder %s248, %s250
      %p257 = scmp.eq.s32.totalorder %s30, 1
      %p258 = por %p256, %p257
      %p259 = scmp.ne.s32.totalorder %s250, %s251
      %p260 = scmp.eq.s32.totalorder %s30, 0
      %p261 = por %p259, %p260
      %p262 = scmp.ne.s32.totalorder %s250, %s251
      %p263 = scmp.eq.s32.totalorder %s31, 1
      %p264 = por %p262, %p263
      %p266 = scmp.ne.s32.totalorder %s251, %s265
      %p267 = scmp.eq.s32.totalorder %s31, 0
      %p268 = por %p266, %p267
      %s270 = sadd.s32 %s269, 1
      %p273 = scmp.eq.s32.totalorder %s25, 1
      %p274 = scmp.ne.s32.totalorder %s269, %s271
      %p275 = scmp.eq.s32.totalorder %s25, 0
      %p276 = por %p274, %p275
      %p277 = scmp.ne.s32.totalorder %s269, %s271
      %p278 = scmp.eq.s32.totalorder %s30, 1
      %p279 = por %p277, %p278
      %p280 = scmp.ne.s32.totalorder %s271, %s272
      %p281 = scmp.eq.s32.totalorder %s30, 0
      %p282 = por %p280, %p281
      %p283 = scmp.ne.s32.totalorder %s271, %s272
      %p284 = scmp.eq.s32.totalorder %s31, 1
      %p285 = por %p283, %p284
      %p287 = scmp.ne.s32.totalorder %s272, %s286
      %p288 = scmp.eq.s32.totalorder %s31, 0
      %p289 = por %p287, %p288
      %s291 = sadd.s32 %s290, 1
      %p294 = scmp.eq.s32.totalorder %s25, 1
      %p295 = scmp.ne.s32.totalorder %s290, %s292
      %p296 = scmp.eq.s32.totalorder %s25, 0
      %p297 = por %p295, %p296
      %p298 = scmp.ne.s32.totalorder %s290, %s292
      %p299 = scmp.eq.s32.totalorder %s30, 1
      %p300 = por %p298, %p299
      %p301 = scmp.ne.s32.totalorder %s292, %s293
      %p302 = scmp.eq.s32.totalorder %s30, 0
      %p303 = por %p301, %p302
      %p304 = scmp.ne.s32.totalorder %s292, %s293
      %p305 = scmp.eq.s32.totalorder %s31, 1
      %p306 = por %p304, %p305
      %p308 = scmp.ne.s32.totalorder %s293, %s307
      %p309 = scmp.eq.s32.totalorder %s31, 0
      %p310 = por %p308, %p309
      %s312 = sadd.s32 %s311, 1
      %p315 = scmp.eq.s32.totalorder %s25, 1
      %p316 = scmp.ne.s32.totalorder %s311, %s313
      %p317 = scmp.eq.s32.totalorder %s25, 0
      %p318 = por %p316, %p317
      %p319 = scmp.ne.s32.totalorder %s311, %s313
      %p320 = scmp.eq.s32.totalorder %s30, 1
      %p321 = por %p319, %p320
      %p322 = scmp.ne.s32.totalorder %s313, %s314
      %p323 = scmp.eq.s32.totalorder %s30, 0
      %p324 = por %p322, %p323
      %p325 = scmp.ne.s32.totalorder %s313, %s314
      %p326 = scmp.eq.s32.totalorder %s31, 1
      %p327 = por %p325, %p326
      %p329 = scmp.ne.s32.totalorder %s314, %s328
      %p330 = scmp.eq.s32.totalorder %s31, 0
      %p331 = por %p329, %p330
      %s333 = sadd.s32 %s332, 1
      %p336 = scmp.eq.s32.totalorder %s25, 1
      %p337 = scmp.ne.s32.totalorder %s332, %s334
      %p338 = scmp.eq.s32.totalorder %s25, 0
      %p339 = por %p337, %p338
      %p340 = scmp.ne.s32.totalorder %s332, %s334
      %p341 = scmp.eq.s32.totalorder %s30, 1
      %p342 = por %p340, %p341
      %p343 = scmp.ne.s32.totalorder %s334, %s335
      %p344 = scmp.eq.s32.totalorder %s30, 0
      %p345 = por %p343, %p344
      %p346 = scmp.ne.s32.totalorder %s334, %s335
      %p347 = scmp.eq.s32.totalorder %s31, 1
      %p348 = por %p346, %p347
      %p350 = scmp.ne.s32.totalorder %s335, %s349
      %p351 = scmp.eq.s32.totalorder %s31, 0
      %p352 = por %p350, %p351
      %s354 = sadd.s32 %s353, 1
      %p357 = scmp.eq.s32.totalorder %s25, 1
      %p358 = scmp.ne.s32.totalorder %s353, %s355
      %p359 = scmp.eq.s32.totalorder %s25, 0
      %p360 = por %p358, %p359
      %p361 = scmp.ne.s32.totalorder %s353, %s355
      %p362 = scmp.eq.s32.totalorder %s30, 1
      %p363 = por %p361, %p362
      %p364 = scmp.ne.s32.totalorder %s355, %s356
      %p365 = scmp.eq.s32.totalorder %s30, 0
      %p366 = por %p364, %p365
      %p367 = scmp.ne.s32.totalorder %s355, %s356
      %p368 = scmp.eq.s32.totalorder %s31, 1
      %p369 = por %p367, %p368
      %p371 = scmp.ne.s32.totalorder %s356, %s370
      %p372 = scmp.eq.s32.totalorder %s31, 0
      %p373 = por %p371, %p372
      %s374 = ssub.s32 %s25, %s32
      %p375 = scmp.eq.s32.totalorder %s374, 0
      %s377 = sadd.s32 %s376, 1
      %s378 = scalar_select %p375, %s376, %s377
      %p381 = pneg %p375
      %p382 = scmp.eq.s32.totalorder %s25, 1
      %p383 = por %p381, %p382
      %p384 = scmp.ne.s32.totalorder %s376, %s379
      %p385 = scmp.eq.s32.totalorder %s25, 0
      %p386 = por %p384, %p385
      %p387 = scmp.ne.s32.totalorder %s376, %s379
      %p388 = scmp.eq.s32.totalorder %s30, 1
      %p389 = por %p387, %p388
      %p390 = scmp.ne.s32.totalorder %s379, %s380
      %p391 = scmp.eq.s32.totalorder %s30, 0
      %p392 = por %p390, %p391
      %p393 = scmp.ne.s32.totalorder %s379, %s380
      %p394 = scmp.eq.s32.totalorder %s31, 1
      %p395 = por %p393, %p394
      %p397 = scmp.ne.s32.totalorder %s380, %s396
      %p398 = scmp.eq.s32.totalorder %s31, 0
      %p399 = por %p397, %p398
      %p400 = scmp.le.s32.totalorder 1, %s25
      %p401 = scmp.lt.s32.totalorder %s25, 3
      %p402 = pnand %p400, %p401
      %p403 = pneg %p402
      // Predicated region
      $region9: #{tpu_custom_call.1} parent=5 // pred_check
        _
      $region10: #{tpu_custom_call.1} parent=5 // pred_check_branch
        %405 = sbr.rel (%p402) target = $region12
      $region11: #{tpu_custom_call.1} parent=5 // pred_region
        %s406 = ssub.s32 %s25, 1
        // Predicated region
        $region13: #{tpu_custom_call.1} parent=11 // pred_check
          %p407 = pneg %p72
        $region14: #{tpu_custom_call.1} parent=11 // pred_check_branch
          %409 = sbr.rel (%p407) target = $region16
        $region15: #{tpu_custom_call.1} parent=11 // pred_region
          _
        $region16: #{tpu_custom_call.1} parent=11 // pred_fallthru
          _
        // Predicated region
        $region17: #{tpu_custom_call.1} parent=11 // pred_check
          %p410 = pneg %p93
        $region18: #{tpu_custom_call.1} parent=11 // pred_check_branch
          %412 = sbr.rel (%p410) target = $region20
        $region19: #{tpu_custom_call.1} parent=11 // pred_region
          _
        $region20: #{tpu_custom_call.1} parent=11 // pred_fallthru
          _
        // Predicated region
        $region21: #{tpu_custom_call.1} parent=11 // pred_check
          %p413 = pneg %p114
        $region22: #{tpu_custom_call.1} parent=11 // pred_check_branch
          %415 = sbr.rel (%p413) target = $region24
        $region23: #{tpu_custom_call.1} parent=11 // pred_region
          _
        $region24: #{tpu_custom_call.1} parent=11 // pred_fallthru
          _
        // Predicated region
        $region25: #{tpu_custom_call.1} parent=11 // pred_check
          %p416 = pneg %p135
        $region26: #{tpu_custom_call.1} parent=11 // pred_check_branch
          %418 = sbr.rel (%p416) target = $region28
        $region27: #{tpu_custom_call.1} parent=11 // pred_region
          _
        $region28: #{tpu_custom_call.1} parent=11 // pred_fallthru
          _
        // Predicated region
        $region29: #{tpu_custom_call.1} parent=11 // pred_check
          %p419 = pneg %p156
        $region30: #{tpu_custom_call.1} parent=11 // pred_check_branch
          %421 = sbr.rel (%p419) target = $region32
        $region31: #{tpu_custom_call.1} parent=11 // pred_region
          _
        $region32: #{tpu_custom_call.1} parent=11 // pred_fallthru
          _
        // Predicated region
        $region33: #{tpu_custom_call.1} parent=11 // pred_check
          %p422 = pneg %p177
        $region34: #{tpu_custom_call.1} parent=11 // pred_check_branch
          %424 = sbr.rel (%p422) target = $region36
        $region35: #{tpu_custom_call.1} parent=11 // pred_region
          _
        $region36: #{tpu_custom_call.1} parent=11 // pred_fallthru
          _
        // Predicated region
        $region37: #{tpu_custom_call.1} parent=11 // pred_check
          %p425 = pneg %p198
        $region38: #{tpu_custom_call.1} parent=11 // pred_check_branch
          %427 = sbr.rel (%p425) target = $region40
        $region39: #{tpu_custom_call.1} parent=11 // pred_region
          _
        $region40: #{tpu_custom_call.1} parent=11 // pred_fallthru
          _
        // Predicated region
        $region41: #{tpu_custom_call.1} parent=11 // pred_check
          %p428 = pneg %p219
        $region42: #{tpu_custom_call.1} parent=11 // pred_check_branch
          %430 = sbr.rel (%p428) target = $region44
        $region43: #{tpu_custom_call.1} parent=11 // pred_region
          _
        $region44: #{tpu_custom_call.1} parent=11 // pred_fallthru
          _
        // Predicated region
        $region45: #{tpu_custom_call.1} parent=11 // pred_check
          %p431 = pneg %p240
        $region46: #{tpu_custom_call.1} parent=11 // pred_check_branch
          %433 = sbr.rel (%p431) target = $region48
        $region47: #{tpu_custom_call.1} parent=11 // pred_region
          _
        $region48: #{tpu_custom_call.1} parent=11 // pred_fallthru
          _
        // Predicated region
        $region49: #{tpu_custom_call.1} parent=11 // pred_check
          %p434 = pneg %p261
        $region50: #{tpu_custom_call.1} parent=11 // pred_check_branch
          %436 = sbr.rel (%p434) target = $region52
        $region51: #{tpu_custom_call.1} parent=11 // pred_region
          _
        $region52: #{tpu_custom_call.1} parent=11 // pred_fallthru
          _
        // Predicated region
        $region53: #{tpu_custom_call.1} parent=11 // pred_check
          %p437 = pneg %p282
        $region54: #{tpu_custom_call.1} parent=11 // pred_check_branch
          %439 = sbr.rel (%p437) target = $region56
        $region55: #{tpu_custom_call.1} parent=11 // pred_region
          _
        $region56: #{tpu_custom_call.1} parent=11 // pred_fallthru
          _
        // Predicated region
        $region57: #{tpu_custom_call.1} parent=11 // pred_check
          %p440 = pneg %p303
        $region58: #{tpu_custom_call.1} parent=11 // pred_check_branch
          %442 = sbr.rel (%p440) target = $region60
        $region59: #{tpu_custom_call.1} parent=11 // pred_region
          _
        $region60: #{tpu_custom_call.1} parent=11 // pred_fallthru
          _
        // Predicated region
        $region61: #{tpu_custom_call.1} parent=11 // pred_check
          %p443 = pneg %p324
        $region62: #{tpu_custom_call.1} parent=11 // pred_check_branch
          %445 = sbr.rel (%p443) target = $region64
        $region63: #{tpu_custom_call.1} parent=11 // pred_region
          _
        $region64: #{tpu_custom_call.1} parent=11 // pred_fallthru
          _
        // Predicated region
        $region65: #{tpu_custom_call.1} parent=11 // pred_check
          %p446 = pneg %p345
        $region66: #{tpu_custom_call.1} parent=11 // pred_check_branch
          %448 = sbr.rel (%p446) target = $region68
        $region67: #{tpu_custom_call.1} parent=11 // pred_region
          _
        $region68: #{tpu_custom_call.1} parent=11 // pred_fallthru
          _
        // Predicated region
        $region69: #{tpu_custom_call.1} parent=11 // pred_check
          %p449 = pneg %p366
        $region70: #{tpu_custom_call.1} parent=11 // pred_check_branch
          %451 = sbr.rel (%p449) target = $region72
        $region71: #{tpu_custom_call.1} parent=11 // pred_region
          _
        $region72: #{tpu_custom_call.1} parent=11 // pred_fallthru
          _
      $region12: #{tpu_custom_call.1} parent=5 // pred_fallthru
        _
      %p452 = scmp.lt.s32.totalorder %s25, 2
      // Predicated region
      $region73: #{tpu_custom_call.1} parent=5 // pred_check
        %p453 = pneg %p452
      $region74: #{tpu_custom_call.1} parent=5 // pred_check_branch
        %455 = sbr.rel (%p453) target = $region76
      $region75: #{tpu_custom_call.1} parent=5 // pred_region
        // Predicated region
        $region77: #{tpu_custom_call.1} parent=75 // pred_check
          %p456 = pneg %p45
        $region78: #{tpu_custom_call.1} parent=75 // pred_check_branch
          %458 = sbr.rel (%p456) target = $region80
        $region79: #{tpu_custom_call.1} parent=75 // pred_region
          %p459 = scmp.lt.s32.totalorder %s25, 1
          %s460 = scalar_select %p459, %s25, 1
          %s461 = smul.addr %s460, 4
          %s462 = smul.addr %s461, 8
          %s463 = scalar_lea.vmem %s0, %s462
        $region80: #{tpu_custom_call.1} parent=75 // pred_fallthru
          _
      $region76: #{tpu_custom_call.1} parent=5 // pred_fallthru
        _
      %p464 = scmp.le.s32.totalorder 1, %s25
      %p465 = scmp.lt.s32.totalorder %s25, 3
      %p466 = pnand %p464, %p465
      %p467 = pneg %p466
      // Predicated region
      $region81: #{tpu_custom_call.1} parent=5 // pred_check
        _
      $region82: #{tpu_custom_call.1} parent=5 // pred_check_branch
        %469 = sbr.rel (%p466) target = $region84
      $region83: #{tpu_custom_call.1} parent=5 // pred_region
        %s470 = ssub.s32 %s25, 1
        %p471 = scmp.lt.s32.totalorder %s30, 1
        %s472 = scalar_select %p471, %s30, 1
        %s473 = smul.addr %s472, 4
        %s474 = smul.addr %s473, 8
        %s475 = scalar_lea.vmem %s0, %s474
        %p476 = pneg %p51
        %p477 = pneg %p48
        %p478 = pneg %p72
        %p479 = pneg %p69
        %p480 = pneg %p93
        %p481 = pneg %p90
        %p482 = pneg %p114
        %p483 = pneg %p111
        %p484 = pneg %p135
        %p485 = pneg %p132
        %p486 = pneg %p156
        %p487 = pneg %p153
        %p488 = pneg %p177
        %p489 = pneg %p174
        %p490 = pneg %p198
        %p491 = pneg %p195
        %p492 = pneg %p219
        %p493 = pneg %p216
        %p494 = pneg %p240
        %p495 = pneg %p237
        %p496 = pneg %p261
        %p497 = pneg %p258
        %p498 = pneg %p282
        %p499 = pneg %p279
        %p500 = pneg %p303
        %p501 = pneg %p300
        %p502 = pneg %p324
        %p503 = pneg %p321
        %p504 = pneg %p345
        %p505 = pneg %p342
        %p506 = pneg %p366
        %p507 = pneg %p363
        %p508 = pneg %p392
        %p509 = pneg %p389
        %s510 = sand.u32 %s379, 1
        %s511 = scalar_lea.sflag [#allocation3], %s510
        %s512 = sand.u32 %s379, 1
        %s513 = scalar_lea.vmem [#allocation2], %s512
        %p514 = scmp.lt.s32.totalorder %s30, 1
        %s515 = scalar_select %p514, %s30, 1
        %s516 = smul.addr %s515, 4
        %s517 = smul.addr %s516, 8
        %s518 = scalar_lea.vmem %s0, %s517
        %v519 = vld [vmem:[%s518] sm:$0xff]
        %v520 = vld [vmem:[%s518 + $0x8] sm:$0xff]
        %v521 = vld [vmem:[%s518 + $0x10] sm:$0xff]
        %v522 = vld [vmem:[%s518 + $0x18] sm:$0xff]
        %v523 = vlaneseq
        %v524 = vand.u32 %v523, 127
        %v525 = vadd.s32 %v524, 1
        %526 = vset.pattern.permute.xlu0 0
        %527 = vperm.xlu0 %526, %v519
        %v528 = vpop.permute.xlu0 %527
        %529 = vset.pattern.permute.xlu0 0
        %530 = vperm.xlu0 %529, %v520
        %v531 = vpop.permute.xlu0 %530
        %532 = vset.pattern.permute.xlu0 0
        %533 = vperm.xlu0 %532, %v521
        %v534 = vpop.permute.xlu0 %533
        %535 = vset.pattern.permute.xlu0 0
        %536 = vperm.xlu0 %535, %v522
        %v537 = vpop.permute.xlu0 %536
        %vm538 = vcmp.eq.s32.totalorder %v528, %v525
        %vm539 = vcmp.eq.s32.totalorder %v531, %v525
        %vm540 = vcmp.eq.s32.totalorder %v534, %v525
        %vm541 = vcmp.eq.s32.totalorder %v537, %v525
        %v542 = vsel %vm538, 1.0, 0.0
        %v543 = vsel %vm539, 1.0, 0.0
        %v544 = vsel %vm540, 1.0, 0.0
        %v545 = vsel %vm541, 1.0, 0.0
        %v546 = vld [vmem:[%s1] sm:$0xff]
        %v547 = vld [vmem:[%s1 + $0x8] sm:$0xff]
        %v548 = vld [vmem:[%s1 + $0x10] sm:$0xff]
        %v549 = vld [vmem:[%s1 + $0x18] sm:$0xff]
        %v550 = vadd.f32 %v542, %v546
        %v551 = vadd.f32 %v543, %v547
        %v552 = vadd.f32 %v544, %v548
        %v553 = vadd.f32 %v545, %v549
        %v554 = vld [vmem:[%s2] sm:$0xf]
        %v555 = vld [vmem:[%s3] sm:$0x1]
        %v557 = vperm.slane %v555, 0
        %vm559 = vcmask 31744
        %v561 = vsel %vm559, %v550, 0
        %v564 = vsel %vm559, %v551, 0
        %v567 = vsel %vm559, %v552, 0
        %v570 = vsel %vm559, %v553, 0
        %vm572 = vcmask 1043456
        %v574 = vsel %vm572, %v554, 0
        %576 = vmatpush.msra.mxu0 0.0
        %577 = vmatpush.msra.mxu0 0.0
        %578 = vmatpush.msra.mxu0 0.0
        %579 = vmatpush.msra.mxu0 0.0
        %580 = vmatpush.msra.mxu0 0.0
        %581 = vmatpush.msra.mxu0 0.0
        %582 = vmatpush.msra.mxu0 0.0
        %583 = vmatpush.msra.mxu0 0.0
        %584 = vmatpush.msra.mxu0 0.0
        %585 = vmatpush.msra.mxu0 0.0
        %586 = vmatpush.msra.mxu0 0.0
        %587 = vmatpush.msra.mxu0 0.0
        %588 = vmatpush.msra.mxu0 0.0
        %589 = vmatpush.msra.mxu0 0.0
        %590 = vmatpush.msra.mxu0 0.0
        %591 = vmatpush.msra.mxu0 %v574
        %592 = vmatmul.f32.gmra.mxu0 %v561
        %v593 = vpop.f32.mrf.mxu0
        %v594 = vadd.f32 %v557, %v593
        %595 = vmatmul.f32.gmra.mxu0 %v564
        %v596 = vpop.f32.mrf.mxu0
        %v597 = vadd.f32 %v557, %v596
        %598 = vmatmul.f32.gmra.mxu0 %v567
        %v599 = vpop.f32.mrf.mxu0
        %v600 = vadd.f32 %v557, %v599
        %601 = vmatmul.f32.gmra.mxu0 %v570
        %v602 = vpop.f32.mrf.mxu0
        %v603 = vadd.f32 %v557, %v602
        %604 = vdwg.mxu0
        %v605 = vld [vmem:[%s4] sm:$0xf]
        %v606 = vld [vmem:[%s5] sm:$0x1]
        %v608 = vperm.slane %v606, 0
        %v611 = vsel %vm572, %v605, 0
        %613 = vmatpush.msra.mxu0 0.0
        %614 = vmatpush.msra.mxu0 0.0
        %615 = vmatpush.msra.mxu0 0.0
        %616 = vmatpush.msra.mxu0 0.0
        %617 = vmatpush.msra.mxu0 0.0
        %618 = vmatpush.msra.mxu0 0.0
        %619 = vmatpush.msra.mxu0 0.0
        %620 = vmatpush.msra.mxu0 0.0
        %621 = vmatpush.msra.mxu0 0.0
        %622 = vmatpush.msra.mxu0 0.0
        %623 = vmatpush.msra.mxu0 0.0
        %624 = vmatpush.msra.mxu0 0.0
        %625 = vmatpush.msra.mxu0 0.0
        %626 = vmatpush.msra.mxu0 0.0
        %627 = vmatpush.msra.mxu0 0.0
        %628 = vmatpush.msra.mxu0 %v611
        %629 = vmatmul.f32.gmra.mxu0 %v561
        %v630 = vpop.f32.mrf.mxu0
        %v631 = vadd.f32 %v608, %v630
        %632 = vmatmul.f32.gmra.mxu0 %v564
        %v633 = vpop.f32.mrf.mxu0
        %v634 = vadd.f32 %v608, %v633
        %635 = vmatmul.f32.gmra.mxu0 %v567
        %v636 = vpop.f32.mrf.mxu0
        %v637 = vadd.f32 %v608, %v636
        %638 = vmatmul.f32.gmra.mxu0 %v570
        %v639 = vpop.f32.mrf.mxu0
        %v640 = vadd.f32 %v608, %v639
        %641 = vdwg.mxu0
        %v642 = vld [vmem:[%s6] sm:$0xf]
        %v644 = vsel %vm572, %v642, 0
        %646 = vmatpush.msra.mxu0 0.0
        %647 = vmatpush.msra.mxu0 0.0
        %648 = vmatpush.msra.mxu0 0.0
        %649 = vmatpush.msra.mxu0 0.0
        %650 = vmatpush.msra.mxu0 0.0
        %651 = vmatpush.msra.mxu0 0.0
        %652 = vmatpush.msra.mxu0 0.0
        %653 = vmatpush.msra.mxu0 0.0
        %654 = vmatpush.msra.mxu0 0.0
        %655 = vmatpush.msra.mxu0 0.0
        %656 = vmatpush.msra.mxu0 0.0
        %657 = vmatpush.msra.mxu0 0.0
        %658 = vmatpush.msra.mxu0 0.0
        %659 = vmatpush.msra.mxu0 0.0
        %660 = vmatpush.msra.mxu0 0.0
        %661 = vmatpush.msra.mxu0 %v644
        %662 = vmatmul.f32.gmra.mxu0 %v561
        %v663 = vpop.f32.mrf.mxu0
        %v664 = vadd.f32 0.0, %v663
        %665 = vmatmul.f32.gmra.mxu0 %v564
        %v666 = vpop.f32.mrf.mxu0
        %v667 = vadd.f32 0.0, %v666
        %668 = vmatmul.f32.gmra.mxu0 %v567
        %v669 = vpop.f32.mrf.mxu0
        %v670 = vadd.f32 0.0, %v669
        %671 = vmatmul.f32.gmra.mxu0 %v570
        %v672 = vpop.f32.mrf.mxu0
        %v673 = vadd.f32 0.0, %v672
        %674 = vdwg.mxu0
        %v676 = vsel %vm559, %v594, 0
        %v679 = vsel %vm559, %v597, 0
        %v682 = vsel %vm559, %v600, 0
        %v685 = vsel %vm559, %v603, 0
        %v688 = vsel %vm559, %v631, 0
        %v691 = vsel %vm559, %v634, 0
        %v694 = vsel %vm559, %v637, 0
        %v697 = vsel %vm559, %v640, 0
        %699 = vmatpush.xpose.msra.mxu0 0.0
        %700 = vmatpush.xpose.msra.mxu0 0.0
        %701 = vmatpush.xpose.msra.mxu0 0.0
        %702 = vmatpush.xpose.msra.mxu0 0.0
        %703 = vmatpush.xpose.msra.mxu0 0.0
        %704 = vmatpush.xpose.msra.mxu0 0.0
        %705 = vmatpush.xpose.msra.mxu0 0.0
        %706 = vmatpush.xpose.msra.mxu0 0.0
        %707 = vmatpush.xpose.msra.mxu0 0.0
        %708 = vmatpush.xpose.msra.mxu0 0.0
        %709 = vmatpush.xpose.msra.mxu0 0.0
        %710 = vmatpush.xpose.msra.mxu0 0.0
        %711 = vmatpush.xpose.msra.mxu0 %v697
        %712 = vmatpush.xpose.msra.mxu0 %v694
        %713 = vmatpush.xpose.msra.mxu0 %v691
        %714 = vmatpush.xpose.msra.mxu0 %v688
        %715 = vmatmul.f32.gmra.mxu0 %v676
        %v716 = vpop.f32.mrf.mxu0
        %v717 = vadd.f32 0.0, %v716
        %718 = vmatmul.f32.gmra.mxu0 %v679
        %v719 = vpop.f32.mrf.mxu0
        %v720 = vadd.f32 0.0, %v719
        %721 = vmatmul.f32.gmra.mxu0 %v682
        %v722 = vpop.f32.mrf.mxu0
        %v723 = vadd.f32 0.0, %v722
        %724 = vmatmul.f32.gmra.mxu0 %v685
        %v725 = vpop.f32.mrf.mxu0
        %v726 = vadd.f32 0.0, %v725
        %727 = vdwg.mxu0
        %vm728 = vcmask 261120
        %v729 = vsel %vm728, %v717, -inf
        %730 = vmax.xlane.f32.xlu0 %v729
        %v731 = vpop.xlane.xlu0 %730
        %v732 = vsel %vm728, %v720, -inf
        %733 = vmax.xlane.f32.xlu0 %v732
        %v734 = vpop.xlane.xlu0 %733
        %v735 = vsel %vm728, %v723, -inf
        %736 = vmax.xlane.f32.xlu0 %v735
        %v737 = vpop.xlane.xlu0 %736
        %v738 = vsel %vm728, %v726, -inf
        %739 = vmax.xlane.f32.xlu0 %v738
        %v740 = vpop.xlane.xlu0 %739
        %v741 = vsub.f32 %v717, %v731
        %v742 = vsub.f32 %v720, %v734
        %v743 = vsub.f32 %v723, %v737
        %v744 = vsub.f32 %v726, %v740
        %v745 = vmul.f32 %v741, 1.442695
        %v746 = vpow.pop %v745
        %v747 = vmul.f32 %v742, 1.442695
        %v748 = vpow.pop %v747
        %v749 = vmul.f32 %v743, 1.442695
        %v750 = vpow.pop %v749
        %v751 = vmul.f32 %v744, 1.442695
        %v752 = vpow.pop %v751
        %v753 = vsel %vm728, %v746, 0.0
        %754 = vadd.xlane.f32.xlu0 %v753
        %v755 = vpop.xlane.xlu0 %754
        %v756 = vsel %vm728, %v748, 0.0
        %757 = vadd.xlane.f32.xlu0 %v756
        %v758 = vpop.xlane.xlu0 %757
        %v759 = vsel %vm728, %v750, 0.0
        %760 = vadd.xlane.f32.xlu0 %v759
        %v761 = vpop.xlane.xlu0 %760
        %v762 = vsel %vm728, %v752, 0.0
        %763 = vadd.xlane.f32.xlu0 %v762
        %v764 = vpop.xlane.xlu0 %763
        %v765 = vrcp.pop %v755
        %v766 = vrcp.pop %v758
        %v767 = vrcp.pop %v761
        %v768 = vrcp.pop %v764
        %v769 = vmul.f32 %v746, %v765
        %v770 = vmul.f32 %v748, %v766
        %v771 = vmul.f32 %v750, %v767
        %v772 = vmul.f32 %v752, %v768
        %v773 = vld [vmem:[%s7] sm:$0x1]
        %v775 = vperm.slane %v773, 0
        %v778 = vsel %vm728, %v769, 0
        %v781 = vsel %vm728, %v770, 0
        %v784 = vsel %vm728, %v771, 0
        %v787 = vsel %vm728, %v772, 0
        %789 = vmatpush.msra.mxu0 0.0
        %790 = vmatpush.msra.mxu0 0.0
        %791 = vmatpush.msra.mxu0 0.0
        %792 = vmatpush.msra.mxu0 0.0
        %793 = vmatpush.msra.mxu0 0.0
        %794 = vmatpush.msra.mxu0 0.0
        %795 = vmatpush.msra.mxu0 0.0
        %796 = vmatpush.msra.mxu0 0.0
        %797 = vmatpush.msra.mxu0 0.0
        %798 = vmatpush.msra.mxu0 0.0
        %799 = vmatpush.msra.mxu0 0.0
        %800 = vmatpush.msra.mxu0 0.0
        %801 = vmatpush.msra.mxu0 %v673
        %802 = vmatpush.msra.mxu0 %v670
        %803 = vmatpush.msra.mxu0 %v667
        %804 = vmatpush.msra.mxu0 %v664
        %805 = vmatmul.f32.gmra.mxu0 %v778
        %v806 = vpop.f32.mrf.mxu0
        %v807 = vadd.f32 %v775, %v806
        %808 = vmatmul.f32.gmra.mxu0 %v781
        %v809 = vpop.f32.mrf.mxu0
        %v810 = vadd.f32 %v775, %v809
        %811 = vmatmul.f32.gmra.mxu0 %v784
        %v812 = vpop.f32.mrf.mxu0
        %v813 = vadd.f32 %v775, %v812
        %814 = vmatmul.f32.gmra.mxu0 %v787
        %v815 = vpop.f32.mrf.mxu0
        %v816 = vadd.f32 %v775, %v815
        %817 = vdwg.mxu0
        %v818 = vadd.f32 %v807, %v550
        %v819 = vadd.f32 %v810, %v551
        %v820 = vadd.f32 %v813, %v552
        %v821 = vadd.f32 %v816, %v553
        %v822 = vld [vmem:[%s8] sm:$0xf]
        %v823 = vld [vmem:[%s9] sm:$0x1]
        %v825 = vperm.slane %v823, 0
        %v828 = vsel %vm559, %v818, 0
        %v831 = vsel %vm559, %v819, 0
        %v834 = vsel %vm559, %v820, 0
        %v837 = vsel %vm559, %v821, 0
        %v840 = vsel %vm572, %v822, 0
        %842 = vmatpush.msra.mxu0 0.0
        %843 = vmatpush.msra.mxu0 0.0
        %844 = vmatpush.msra.mxu0 0.0
        %845 = vmatpush.msra.mxu0 0.0
        %846 = vmatpush.msra.mxu0 0.0
        %847 = vmatpush.msra.mxu0 0.0
        %848 = vmatpush.msra.mxu0 0.0
        %849 = vmatpush.msra.mxu0 0.0
        %850 = vmatpush.msra.mxu0 0.0
        %851 = vmatpush.msra.mxu0 0.0
        %852 = vmatpush.msra.mxu0 0.0
        %853 = vmatpush.msra.mxu0 0.0
        %854 = vmatpush.msra.mxu0 0.0
        %855 = vmatpush.msra.mxu0 0.0
        %856 = vmatpush.msra.mxu0 0.0
        %857 = vmatpush.msra.mxu0 %v840
        %858 = vmatmul.f32.gmra.mxu0 %v828
        %v859 = vpop.f32.mrf.mxu0
        %v860 = vadd.f32 %v825, %v859
        %861 = vmatmul.f32.gmra.mxu0 %v831
        %v862 = vpop.f32.mrf.mxu0
        %v863 = vadd.f32 %v825, %v862
        %864 = vmatmul.f32.gmra.mxu0 %v834
        %v865 = vpop.f32.mrf.mxu0
        %v866 = vadd.f32 %v825, %v865
        %867 = vmatmul.f32.gmra.mxu0 %v837
        %v868 = vpop.f32.mrf.mxu0
        %v869 = vadd.f32 %v825, %v868
        %870 = vdwg.mxu0
        %v871 = vmax.f32 %v860, 0.0
        %v872 = vmax.f32 %v863, 0.0
        %v873 = vmax.f32 %v866, 0.0
        %v874 = vmax.f32 %v869, 0.0
        %v875 = vld [vmem:[%s10] sm:$0xff]
        %v876 = vld [vmem:[%s10 + $0x8] sm:$0xff]
        %v877 = vld [vmem:[%s10 + $0x10] sm:$0xff]
        %v878 = vld [vmem:[%s10 + $0x18] sm:$0xff]
        %v879 = vld [vmem:[%s10 + $0x20] sm:$0xff]
        %v880 = vld [vmem:[%s10 + $0x28] sm:$0xff]
        %v881 = vld [vmem:[%s10 + $0x30] sm:$0xff]
        %v882 = vld [vmem:[%s10 + $0x38] sm:$0xff]
        %v883 = vld [vmem:[%s10 + $0x40] sm:$0xff]
        %v884 = vld [vmem:[%s10 + $0x48] sm:$0xff]
        %v885 = vld [vmem:[%s10 + $0x50] sm:$0xff]
        %v886 = vld [vmem:[%s10 + $0x58] sm:$0xff]
        %v887 = vld [vmem:[%s10 + $0x60] sm:$0xff]
        %v888 = vld [vmem:[%s10 + $0x68] sm:$0xff]
        %v889 = vld [vmem:[%s10 + $0x70] sm:$0xff]
        %v890 = vld [vmem:[%s10 + $0x78] sm:$0xff]
        %v891 = vld [vmem:[%s11] sm:$0x1]
        %v893 = vperm.slane %v891, 0
        %895 = vmatpush.msra.mxu0 %v890
        %896 = vmatpush.msra.mxu0 %v889
        %897 = vmatpush.msra.mxu0 %v888
        %898 = vmatpush.msra.mxu0 %v887
        %899 = vmatpush.msra.mxu0 %v886
        %900 = vmatpush.msra.mxu0 %v885
        %901 = vmatpush.msra.mxu0 %v884
        %902 = vmatpush.msra.mxu0 %v883
        %903 = vmatpush.msra.mxu0 %v882
        %904 = vmatpush.msra.mxu0 %v881
        %905 = vmatpush.msra.mxu0 %v880
        %906 = vmatpush.msra.mxu0 %v879
        %907 = vmatpush.msra.mxu0 %v878
        %908 = vmatpush.msra.mxu0 %v877
        %909 = vmatpush.msra.mxu0 %v876
        %910 = vmatpush.msra.mxu0 %v875
        %911 = vmatmul.f32.gmra.mxu0 %v871
        %v912 = vpop.f32.mrf.mxu0
        %v913 = vadd.f32 %v893, %v912
        %914 = vmatmul.f32.gmra.mxu0 %v872
        %v915 = vpop.f32.mrf.mxu0
        %v916 = vadd.f32 %v893, %v915
        %917 = vmatmul.f32.gmra.mxu0 %v873
        %v918 = vpop.f32.mrf.mxu0
        %v919 = vadd.f32 %v893, %v918
        %920 = vmatmul.f32.gmra.mxu0 %v874
        %v921 = vpop.f32.mrf.mxu0
        %v922 = vadd.f32 %v893, %v921
        %923 = vdwg.mxu0
        %v924 = vmax.f32 %v913, 0.0
        %v925 = vmax.f32 %v916, 0.0
        %v926 = vmax.f32 %v919, 0.0
        %v927 = vmax.f32 %v922, 0.0
        %v928 = vadd.f32 %v924, %v818
        %v929 = vadd.f32 %v925, %v819
        %v930 = vadd.f32 %v926, %v820
        %v931 = vadd.f32 %v927, %v821
        %v932 = vld [vmem:[%s12] sm:$0xff]
        %v933 = vld [vmem:[%s12 + $0x8] sm:$0xff]
        %v934 = vld [vmem:[%s12 + $0x10] sm:$0xff]
        %v935 = vld [vmem:[%s12 + $0x18] sm:$0xff]
        %v936 = vld [vmem:[%s12 + $0x20] sm:$0xff]
        %v937 = vld [vmem:[%s12 + $0x28] sm:$0xff]
        %v938 = vld [vmem:[%s12 + $0x30] sm:$0xff]
        %v939 = vld [vmem:[%s12 + $0x38] sm:$0xff]
        %v940 = vld [vmem:[%s12 + $0x40] sm:$0xff]
        %v941 = vld [vmem:[%s12 + $0x48] sm:$0xff]
        %v942 = vld [vmem:[%s12 + $0x50] sm:$0xff]
        %v943 = vld [vmem:[%s12 + $0x58] sm:$0xff]
        %v944 = vld [vmem:[%s12 + $0x60] sm:$0xff]
        %v945 = vld [vmem:[%s12 + $0x68] sm:$0xff]
        %v946 = vld [vmem:[%s12 + $0x70] sm:$0xff]
        %v947 = vld [vmem:[%s12 + $0x78] sm:$0xff]
        %949 = vset.pattern.permute.xlu0 0
        %950 = vperm.xlu0 %949, %v928
        %v951 = vpop.permute.xlu0 %950
        %954 = vset.pattern.permute.xlu0 0
        %955 = vperm.xlu0 %954, %v929
        %v956 = vpop.permute.xlu0 %955
        %959 = vset.pattern.permute.xlu0 0
        %960 = vperm.xlu0 %959, %v930
        %v961 = vpop.permute.xlu0 %960
        %964 = vset.pattern.permute.xlu0 0
        %965 = vperm.xlu0 %964, %v931
        %v966 = vpop.permute.xlu0 %965
        %v968 = vmul.f32 %v951, %v932
        %v969 = vmul.f32 %v951, %v933
        %v970 = vmul.f32 %v951, %v934
        %v971 = vmul.f32 %v951, %v935
        %v972 = vmul.f32 %v956, %v936
        %v973 = vmul.f32 %v956, %v937
        %v974 = vmul.f32 %v956, %v938
        %v975 = vmul.f32 %v956, %v939
        %v976 = vmul.f32 %v961, %v940
        %v977 = vmul.f32 %v961, %v941
        %v978 = vmul.f32 %v961, %v942
        %v979 = vmul.f32 %v961, %v943
        %v980 = vmul.f32 %v966, %v944
        %v981 = vmul.f32 %v966, %v945
        %v982 = vmul.f32 %v966, %v946
        %v983 = vmul.f32 %v966, %v947
        %s984 = scalar_lea.vmem %s12, 128
        %v985 = vld [vmem:[%s984] sm:$0xff]
        %v986 = vld [vmem:[%s984 + $0x8] sm:$0xff]
        %v987 = vld [vmem:[%s984 + $0x10] sm:$0xff]
        %v988 = vld [vmem:[%s984 + $0x18] sm:$0xff]
        %v989 = vld [vmem:[%s984 + $0x20] sm:$0xff]
        %v990 = vld [vmem:[%s984 + $0x28] sm:$0xff]
        %v991 = vld [vmem:[%s984 + $0x30] sm:$0xff]
        %v992 = vld [vmem:[%s984 + $0x38] sm:$0xff]
        %v993 = vld [vmem:[%s984 + $0x40] sm:$0xff]
        %v994 = vld [vmem:[%s984 + $0x48] sm:$0xff]
        %v995 = vld [vmem:[%s984 + $0x50] sm:$0xff]
        %v996 = vld [vmem:[%s984 + $0x58] sm:$0xff]
        %v997 = vld [vmem:[%s984 + $0x60] sm:$0xff]
        %v998 = vld [vmem:[%s984 + $0x68] sm:$0xff]
        %v999 = vld [vmem:[%s984 + $0x70] sm:$0xff]
        %v1000 = vld [vmem:[%s984 + $0x78] sm:$0xff]
        %1001 = vset.pattern.permute.xlu0 1
        %1002 = vperm.xlu0 %1001, %v928
        %v1003 = vpop.permute.xlu0 %1002
        %1005 = vset.pattern.permute.xlu0 1
        %1006 = vperm.xlu0 %1005, %v929
        %v1007 = vpop.permute.xlu0 %1006
        %1009 = vset.pattern.permute.xlu0 1
        %1010 = vperm.xlu0 %1009, %v930
        %v1011 = vpop.permute.xlu0 %1010
        %1013 = vset.pattern.permute.xlu0 1
        %1014 = vperm.xlu0 %1013, %v931
        %v1015 = vpop.permute.xlu0 %1014
        %v1017 = vmul.f32 %v1003, %v985
        %v1018 = vmul.f32 %v1003, %v986
        %v1019 = vmul.f32 %v1003, %v987
        %v1020 = vmul.f32 %v1003, %v988
        %v1021 = vmul.f32 %v1007, %v989
        %v1022 = vmul.f32 %v1007, %v990
        %v1023 = vmul.f32 %v1007, %v991
        %v1024 = vmul.f32 %v1007, %v992
        %v1025 = vmul.f32 %v1011, %v993
        %v1026 = vmul.f32 %v1011, %v994
        %v1027 = vmul.f32 %v1011, %v995
        %v1028 = vmul.f32 %v1011, %v996
        %v1029 = vmul.f32 %v1015, %v997
        %v1030 = vmul.f32 %v1015, %v998
        %v1031 = vmul.f32 %v1015, %v999
        %v1032 = vmul.f32 %v1015, %v1000
        %v1033 = vadd.f32 %v968, %v1017
        %v1034 = vadd.f32 %v969, %v1018
        %v1035 = vadd.f32 %v970, %v1019
        %v1036 = vadd.f32 %v971, %v1020
        %v1037 = vadd.f32 %v972, %v1021
        %v1038 = vadd.f32 %v973, %v1022
        %v1039 = vadd.f32 %v974, %v1023
        %v1040 = vadd.f32 %v975, %v1024
        %v1041 = vadd.f32 %v976, %v1025
        %v1042 = vadd.f32 %v977, %v1026
        %v1043 = vadd.f32 %v978, %v1027
        %v1044 = vadd.f32 %v979, %v1028
        %v1045 = vadd.f32 %v980, %v1029
        %v1046 = vadd.f32 %v981, %v1030
        %v1047 = vadd.f32 %v982, %v1031
        %v1048 = vadd.f32 %v983, %v1032
        %s1049 = scalar_lea.vmem %s12, 256
        %v1050 = vld [vmem:[%s1049] sm:$0xff]
        %v1051 = vld [vmem:[%s1049 + $0x8] sm:$0xff]
        %v1052 = vld [vmem:[%s1049 + $0x10] sm:$0xff]
        %v1053 = vld [vmem:[%s1049 + $0x18] sm:$0xff]
        %v1054 = vld [vmem:[%s1049 + $0x20] sm:$0xff]
        %v1055 = vld [vmem:[%s1049 + $0x28] sm:$0xff]
        %v1056 = vld [vmem:[%s1049 + $0x30] sm:$0xff]
        %v1057 = vld [vmem:[%s1049 + $0x38] sm:$0xff]
        %v1058 = vld [vmem:[%s1049 + $0x40] sm:$0xff]
        %v1059 = vld [vmem:[%s1049 + $0x48] sm:$0xff]
        %v1060 = vld [vmem:[%s1049 + $0x50] sm:$0xff]
        %v1061 = vld [vmem:[%s1049 + $0x58] sm:$0xff]
        %v1062 = vld [vmem:[%s1049 + $0x60] sm:$0xff]
        %v1063 = vld [vmem:[%s1049 + $0x68] sm:$0xff]
        %v1064 = vld [vmem:[%s1049 + $0x70] sm:$0xff]
        %v1065 = vld [vmem:[%s1049 + $0x78] sm:$0xff]
        %1066 = vset.pattern.permute.xlu0 2
        %1067 = vperm.xlu0 %1066, %v928
        %v1068 = vpop.permute.xlu0 %1067
        %1070 = vset.pattern.permute.xlu0 2
        %1071 = vperm.xlu0 %1070, %v929
        %v1072 = vpop.permute.xlu0 %1071
        %1074 = vset.pattern.permute.xlu0 2
        %1075 = vperm.xlu0 %1074, %v930
        %v1076 = vpop.permute.xlu0 %1075
        %1078 = vset.pattern.permute.xlu0 2
        %1079 = vperm.xlu0 %1078, %v931
        %v1080 = vpop.permute.xlu0 %1079
        %v1082 = vmul.f32 %v1068, %v1050
        %v1083 = vmul.f32 %v1068, %v1051
        %v1084 = vmul.f32 %v1068, %v1052
        %v1085 = vmul.f32 %v1068, %v1053
        %v1086 = vmul.f32 %v1072, %v1054
        %v1087 = vmul.f32 %v1072, %v1055
        %v1088 = vmul.f32 %v1072, %v1056
        %v1089 = vmul.f32 %v1072, %v1057
        %v1090 = vmul.f32 %v1076, %v1058
        %v1091 = vmul.f32 %v1076, %v1059
        %v1092 = vmul.f32 %v1076, %v1060
        %v1093 = vmul.f32 %v1076, %v1061
        %v1094 = vmul.f32 %v1080, %v1062
        %v1095 = vmul.f32 %v1080, %v1063
        %v1096 = vmul.f32 %v1080, %v1064
        %v1097 = vmul.f32 %v1080, %v1065
        %v1098 = vadd.f32 %v1033, %v1082
        %v1099 = vadd.f32 %v1034, %v1083
        %v1100 = vadd.f32 %v1035, %v1084
        %v1101 = vadd.f32 %v1036, %v1085
        %v1102 = vadd.f32 %v1037, %v1086
        %v1103 = vadd.f32 %v1038, %v1087
        %v1104 = vadd.f32 %v1039, %v1088
        %v1105 = vadd.f32 %v1040, %v1089
        %v1106 = vadd.f32 %v1041, %v1090
        %v1107 = vadd.f32 %v1042, %v1091
        %v1108 = vadd.f32 %v1043, %v1092
        %v1109 = vadd.f32 %v1044, %v1093
        %v1110 = vadd.f32 %v1045, %v1094
        %v1111 = vadd.f32 %v1046, %v1095
        %v1112 = vadd.f32 %v1047, %v1096
        %v1113 = vadd.f32 %v1048, %v1097
        %s1114 = scalar_lea.vmem %s12, 384
        %v1115 = vld [vmem:[%s1114] sm:$0xff]
        %v1116 = vld [vmem:[%s1114 + $0x8] sm:$0xff]
        %v1117 = vld [vmem:[%s1114 + $0x10] sm:$0xff]
        %v1118 = vld [vmem:[%s1114 + $0x18] sm:$0xff]
        %v1119 = vld [vmem:[%s1114 + $0x20] sm:$0xff]
        %v1120 = vld [vmem:[%s1114 + $0x28] sm:$0xff]
        %v1121 = vld [vmem:[%s1114 + $0x30] sm:$0xff]
        %v1122 = vld [vmem:[%s1114 + $0x38] sm:$0xff]
        %v1123 = vld [vmem:[%s1114 + $0x40] sm:$0xff]
        %v1124 = vld [vmem:[%s1114 + $0x48] sm:$0xff]
        %v1125 = vld [vmem:[%s1114 + $0x50] sm:$0xff]
        %v1126 = vld [vmem:[%s1114 + $0x58] sm:$0xff]
        %v1127 = vld [vmem:[%s1114 + $0x60] sm:$0xff]
        %v1128 = vld [vmem:[%s1114 + $0x68] sm:$0xff]
        %v1129 = vld [vmem:[%s1114 + $0x70] sm:$0xff]
        %v1130 = vld [vmem:[%s1114 + $0x78] sm:$0xff]
        %1131 = vset.pattern.permute.xlu0 3
        %1132 = vperm.xlu0 %1131, %v928
        %v1133 = vpop.permute.xlu0 %1132
        %1135 = vset.pattern.permute.xlu0 3
        %1136 = vperm.xlu0 %1135, %v929
        %v1137 = vpop.permute.xlu0 %1136
        %1139 = vset.pattern.permute.xlu0 3
        %1140 = vperm.xlu0 %1139, %v930
        %v1141 = vpop.permute.xlu0 %1140
        %1143 = vset.pattern.permute.xlu0 3
        %1144 = vperm.xlu0 %1143, %v931
        %v1145 = vpop.permute.xlu0 %1144
        %v1147 = vmul.f32 %v1133, %v1115
        %v1148 = vmul.f32 %v1133, %v1116
        %v1149 = vmul.f32 %v1133, %v1117
        %v1150 = vmul.f32 %v1133, %v1118
        %v1151 = vmul.f32 %v1137, %v1119
        %v1152 = vmul.f32 %v1137, %v1120
        %v1153 = vmul.f32 %v1137, %v1121
        %v1154 = vmul.f32 %v1137, %v1122
        %v1155 = vmul.f32 %v1141, %v1123
        %v1156 = vmul.f32 %v1141, %v1124
        %v1157 = vmul.f32 %v1141, %v1125
        %v1158 = vmul.f32 %v1141, %v1126
        %v1159 = vmul.f32 %v1145, %v1127
        %v1160 = vmul.f32 %v1145, %v1128
        %v1161 = vmul.f32 %v1145, %v1129
        %v1162 = vmul.f32 %v1145, %v1130
        %v1163 = vadd.f32 %v1098, %v1147
        %v1164 = vadd.f32 %v1099, %v1148
        %v1165 = vadd.f32 %v1100, %v1149
        %v1166 = vadd.f32 %v1101, %v1150
        %v1167 = vadd.f32 %v1102, %v1151
        %v1168 = vadd.f32 %v1103, %v1152
        %v1169 = vadd.f32 %v1104, %v1153
        %v1170 = vadd.f32 %v1105, %v1154
        %v1171 = vadd.f32 %v1106, %v1155
        %v1172 = vadd.f32 %v1107, %v1156
        %v1173 = vadd.f32 %v1108, %v1157
        %v1174 = vadd.f32 %v1109, %v1158
        %v1175 = vadd.f32 %v1110, %v1159
        %v1176 = vadd.f32 %v1111, %v1160
        %v1177 = vadd.f32 %v1112, %v1161
        %v1178 = vadd.f32 %v1113, %v1162
        %v1179 = vadd.f32 %v1163, %v1167
        %v1180 = vadd.f32 %v1179, %v1171
        %v1181 = vadd.f32 %v1180, %v1175
        %v1182 = vrot.slane %v1181, 4
        %v1183 = vadd.f32 %v1181, %v1182
        %v1184 = vrot.slane %v1183, 2
        %v1185 = vadd.f32 %v1183, %v1184
        %v1186 = vrot.slane %v1185, 1
        %v1187 = vadd.f32 %v1185, %v1186
        %v1188 = vadd.f32 %v1164, %v1168
        %v1189 = vadd.f32 %v1188, %v1172
        %v1190 = vadd.f32 %v1189, %v1176
        %v1191 = vrot.slane %v1190, 4
        %v1192 = vadd.f32 %v1190, %v1191
        %v1193 = vrot.slane %v1192, 2
        %v1194 = vadd.f32 %v1192, %v1193
        %v1195 = vrot.slane %v1194, 1
        %v1196 = vadd.f32 %v1194, %v1195
        %v1197 = vadd.f32 %v1165, %v1169
        %v1198 = vadd.f32 %v1197, %v1173
        %v1199 = vadd.f32 %v1198, %v1177
        %v1200 = vrot.slane %v1199, 4
        %v1201 = vadd.f32 %v1199, %v1200
        %v1202 = vrot.slane %v1201, 2
        %v1203 = vadd.f32 %v1201, %v1202
        %v1204 = vrot.slane %v1203, 1
        %v1205 = vadd.f32 %v1203, %v1204
        %v1206 = vadd.f32 %v1166, %v1170
        %v1207 = vadd.f32 %v1206, %v1174
        %v1208 = vadd.f32 %v1207, %v1178
        %v1209 = vrot.slane %v1208, 4
        %v1210 = vadd.f32 %v1208, %v1209
        %v1211 = vrot.slane %v1210, 2
        %v1212 = vadd.f32 %v1210, %v1211
        %v1213 = vrot.slane %v1212, 1
        %v1214 = vadd.f32 %v1212, %v1213
        %v1215 = vld [vmem:[%s13] sm:$0xf]
        %v1217 = vperm.slane %v1215, 0
        %v1218 = vperm.slane %v1215, 1
        %v1219 = vperm.slane %v1215, 2
        %v1220 = vperm.slane %v1215, 3
        %v1225 = vadd.f32 %v1187, %v1217
        %v1226 = vadd.f32 %v1196, %v1218
        %v1227 = vadd.f32 %v1205, %v1219
        %v1228 = vadd.f32 %v1214, %v1220
        %v1229 = vmax.f32 %v1225, 0.0
        %v1230 = vmax.f32 %v1226, 0.0
        %v1231 = vmax.f32 %v1227, 0.0
        %v1232 = vmax.f32 %v1228, 0.0
        %v1233 = vld [vmem:[%s14] sm:$0xff]
        %v1234 = vld [vmem:[%s14 + $0x8] sm:$0xff]
        %v1235 = vld [vmem:[%s14 + $0x10] sm:$0xff]
        %v1236 = vld [vmem:[%s14 + $0x18] sm:$0xff]
        %v1237 = vld [vmem:[%s14 + $0x20] sm:$0xff]
        %v1238 = vld [vmem:[%s14 + $0x28] sm:$0xff]
        %v1239 = vld [vmem:[%s14 + $0x30] sm:$0xff]
        %v1240 = vld [vmem:[%s14 + $0x38] sm:$0xff]
        %v1241 = vld [vmem:[%s14 + $0x40] sm:$0xff]
        %v1242 = vld [vmem:[%s14 + $0x48] sm:$0xff]
        %v1243 = vld [vmem:[%s14 + $0x50] sm:$0xff]
        %v1244 = vld [vmem:[%s14 + $0x58] sm:$0xff]
        %v1245 = vld [vmem:[%s14 + $0x60] sm:$0xff]
        %v1246 = vld [vmem:[%s14 + $0x68] sm:$0xff]
        %v1247 = vld [vmem:[%s14 + $0x70] sm:$0xff]
        %v1248 = vld [vmem:[%s14 + $0x78] sm:$0xff]
        %v1249 = vld [vmem:[%s14 + $0x80] sm:$0xff]
        %v1250 = vld [vmem:[%s14 + $0x88] sm:$0xff]
        %v1251 = vld [vmem:[%s14 + $0x90] sm:$0xff]
        %v1252 = vld [vmem:[%s14 + $0x98] sm:$0xff]
        %v1253 = vld [vmem:[%s14 + $0xa0] sm:$0xff]
        %v1254 = vld [vmem:[%s14 + $0xa8] sm:$0xff]
        %v1255 = vld [vmem:[%s14 + $0xb0] sm:$0xff]
        %v1256 = vld [vmem:[%s14 + $0xb8] sm:$0xff]
        %v1257 = vld [vmem:[%s14 + $0xc0] sm:$0xff]
        %v1258 = vld [vmem:[%s14 + $0xc8] sm:$0xff]
        %v1259 = vld [vmem:[%s14 + $0xd0] sm:$0xff]
        %v1260 = vld [vmem:[%s14 + $0xd8] sm:$0xff]
        %v1261 = vld [vmem:[%s14 + $0xe0] sm:$0xff]
        %v1262 = vld [vmem:[%s14 + $0xe8] sm:$0xff]
        %v1263 = vld [vmem:[%s14 + $0xf0] sm:$0xff]
        %v1264 = vld [vmem:[%s14 + $0xf8] sm:$0xff]
        %v1265 = vld [vmem:[%s14 + $0x100] sm:$0xff]
        %v1266 = vld [vmem:[%s14 + $0x108] sm:$0xff]
        %v1267 = vld [vmem:[%s14 + $0x110] sm:$0xff]
        %v1268 = vld [vmem:[%s14 + $0x118] sm:$0xff]
        %v1269 = vld [vmem:[%s14 + $0x120] sm:$0xff]
        %v1270 = vld [vmem:[%s14 + $0x128] sm:$0xff]
        %v1271 = vld [vmem:[%s14 + $0x130] sm:$0xff]
        %v1272 = vld [vmem:[%s14 + $0x138] sm:$0xff]
        %v1273 = vld [vmem:[%s14 + $0x140] sm:$0xff]
        %v1274 = vld [vmem:[%s14 + $0x148] sm:$0xff]
        %v1275 = vld [vmem:[%s14 + $0x150] sm:$0xff]
        %v1276 = vld [vmem:[%s14 + $0x158] sm:$0xff]
        %v1277 = vld [vmem:[%s14 + $0x160] sm:$0xff]
        %v1278 = vld [vmem:[%s14 + $0x168] sm:$0xff]
        %v1279 = vld [vmem:[%s14 + $0x170] sm:$0xff]
        %v1280 = vld [vmem:[%s14 + $0x178] sm:$0xff]
        %v1281 = vld [vmem:[%s14 + $0x180] sm:$0xff]
        %v1282 = vld [vmem:[%s14 + $0x188] sm:$0xff]
        %v1283 = vld [vmem:[%s14 + $0x190] sm:$0xff]
        %v1284 = vld [vmem:[%s14 + $0x198] sm:$0xff]
        %v1285 = vld [vmem:[%s14 + $0x1a0] sm:$0xff]
        %v1286 = vld [vmem:[%s14 + $0x1a8] sm:$0xff]
        %v1287 = vld [vmem:[%s14 + $0x1b0] sm:$0xff]
        %v1288 = vld [vmem:[%s14 + $0x1b8] sm:$0xff]
        %v1289 = vld [vmem:[%s14 + $0x1c0] sm:$0xff]
        %v1290 = vld [vmem:[%s14 + $0x1c8] sm:$0xff]
        %v1291 = vld [vmem:[%s14 + $0x1d0] sm:$0xff]
        %v1292 = vld [vmem:[%s14 + $0x1d8] sm:$0xff]
        %v1293 = vld [vmem:[%s14 + $0x1e0] sm:$0xff]
        %v1294 = vld [vmem:[%s14 + $0x1e8] sm:$0xff]
        %v1295 = vld [vmem:[%s14 + $0x1f0] sm:$0xff]
        %v1296 = vld [vmem:[%s14 + $0x1f8] sm:$0xff]
        %v1297 = vld [vmem:[%s15] sm:$0x1]
        %1298 = vmatpush.msra.mxu0 %v1248
        %1299 = vmatpush.msra.mxu0 %v1247
        %1300 = vmatpush.msra.mxu0 %v1246
        %1301 = vmatpush.msra.mxu0 %v1245
        %1302 = vmatpush.msra.mxu0 %v1244
        %1303 = vmatpush.msra.mxu0 %v1243
        %1304 = vmatpush.msra.mxu0 %v1242
        %1305 = vmatpush.msra.mxu0 %v1241
        %1306 = vmatpush.msra.mxu0 %v1240
        %1307 = vmatpush.msra.mxu0 %v1239
        %1308 = vmatpush.msra.mxu0 %v1238
        %1309 = vmatpush.msra.mxu0 %v1237
        %1310 = vmatpush.msra.mxu0 %v1236
        %1311 = vmatpush.msra.mxu0 %v1235
        %1312 = vmatpush.msra.mxu0 %v1234
        %1313 = vmatpush.msra.mxu0 %v1233
        %1314 = vmatmul.f32.gmra.mxu0 %v1229
        %v1315 = vpop.f32.mrf.mxu0
        %v1316 = vadd.f32 %v1297, %v1315
        %1317 = vdwg.mxu0
        %1318 = vmatpush.msra.mxu0 %v1264
        %1319 = vmatpush.msra.mxu0 %v1263
        %1320 = vmatpush.msra.mxu0 %v1262
        %1321 = vmatpush.msra.mxu0 %v1261
        %1322 = vmatpush.msra.mxu0 %v1260
        %1323 = vmatpush.msra.mxu0 %v1259
        %1324 = vmatpush.msra.mxu0 %v1258
        %1325 = vmatpush.msra.mxu0 %v1257
        %1326 = vmatpush.msra.mxu0 %v1256
        %1327 = vmatpush.msra.mxu0 %v1255
        %1328 = vmatpush.msra.mxu0 %v1254
        %1329 = vmatpush.msra.mxu0 %v1253
        %1330 = vmatpush.msra.mxu0 %v1252
        %1331 = vmatpush.msra.mxu0 %v1251
        %1332 = vmatpush.msra.mxu0 %v1250
        %1333 = vmatpush.msra.mxu0 %v1249
        %1334 = vmatmul.f32.gmra.mxu0 %v1230
        %v1335 = vpop.f32.mrf.mxu0
        %v1336 = vadd.f32 %v1316, %v1335
        %1337 = vdwg.mxu0
        %1338 = vmatpush.msra.mxu0 %v1280
        %1339 = vmatpush.msra.mxu0 %v1279
        %1340 = vmatpush.msra.mxu0 %v1278
        %1341 = vmatpush.msra.mxu0 %v1277
        %1342 = vmatpush.msra.mxu0 %v1276
        %1343 = vmatpush.msra.mxu0 %v1275
        %1344 = vmatpush.msra.mxu0 %v1274
        %1345 = vmatpush.msra.mxu0 %v1273
        %1346 = vmatpush.msra.mxu0 %v1272
        %1347 = vmatpush.msra.mxu0 %v1271
        %1348 = vmatpush.msra.mxu0 %v1270
        %1349 = vmatpush.msra.mxu0 %v1269
        %1350 = vmatpush.msra.mxu0 %v1268
        %1351 = vmatpush.msra.mxu0 %v1267
        %1352 = vmatpush.msra.mxu0 %v1266
        %1353 = vmatpush.msra.mxu0 %v1265
        %1354 = vmatmul.f32.gmra.mxu0 %v1231
        %v1355 = vpop.f32.mrf.mxu0
        %v1356 = vadd.f32 %v1336, %v1355
        %1357 = vdwg.mxu0
        %1358 = vmatpush.msra.mxu0 %v1296
        %1359 = vmatpush.msra.mxu0 %v1295
        %1360 = vmatpush.msra.mxu0 %v1294
        %1361 = vmatpush.msra.mxu0 %v1293
        %1362 = vmatpush.msra.mxu0 %v1292
        %1363 = vmatpush.msra.mxu0 %v1291
        %1364 = vmatpush.msra.mxu0 %v1290
        %1365 = vmatpush.msra.mxu0 %v1289
        %1366 = vmatpush.msra.mxu0 %v1288
        %1367 = vmatpush.msra.mxu0 %v1287
        %1368 = vmatpush.msra.mxu0 %v1286
        %1369 = vmatpush.msra.mxu0 %v1285
        %1370 = vmatpush.msra.mxu0 %v1284
        %1371 = vmatpush.msra.mxu0 %v1283
        %1372 = vmatpush.msra.mxu0 %v1282
        %1373 = vmatpush.msra.mxu0 %v1281
        %1374 = vmatmul.f32.gmra.mxu0 %v1232
        %v1375 = vpop.f32.mrf.mxu0
        %v1376 = vadd.f32 %v1356, %v1375
        %1377 = vdwg.mxu0
        %vm1378 = vcmask 57344
        %1379 = vst.msk [vmem:[%s513] sm:$0x1] %vm1378, %v1376
        %s1380 = sand.u32 %s379, 1
        %s1381 = scalar_lea.sflag [#allocation3], %s1380
        %s1382 = sand.u32 %s379, 1
        %s1383 = scalar_lea.vmem [#allocation2], %s1382
        // Predicated region
        $region85: #{tpu_custom_call.1} parent=83 // pred_check
          %p1384 = pneg %p389
        $region86: #{tpu_custom_call.1} parent=83 // pred_check_branch
          %1386 = sbr.rel (%p1384) target = $region88
        $region87: #{tpu_custom_call.1} parent=83 // pred_region
          %1388 = vsyncadd %s1381, 0
          %s1389 = scalar_lea.hbm %s16, %s30
          %s1391 = sshll.u32 %s1383, 4
          %s1392 = int_to_ptr.vmem [resolvable:$true] %s1391
          %s1393 = sshll.u32 %s1389, 4
          %s1394 = int_to_ptr.hbm [resolvable:$true] %s1393
          %1396 = dma.vmem_to_hbm [thread:$0]  %s1392, 16, %s1394, %s1381
        $region88: #{tpu_custom_call.1} parent=83 // pred_fallthru
          _
      $region84: #{tpu_custom_call.1} parent=5 // pred_fallthru
        _
      %p1397 = scmp.le.s32.totalorder 2, %s25
      // Predicated region
      $region89: #{tpu_custom_call.1} parent=5 // pred_check
        %p1398 = pneg %p1397
      $region90: #{tpu_custom_call.1} parent=5 // pred_check_branch
        %1400 = sbr.rel (%p1398) target = $region92
      $region91: #{tpu_custom_call.1} parent=5 // pred_region
        %s1401 = ssub.s32 %s25, 2
        // Predicated region
        $region93: #{tpu_custom_call.1} parent=91 // pred_check
          %p1402 = pneg %p395
        $region94: #{tpu_custom_call.1} parent=91 // pred_check_branch
          %1404 = sbr.rel (%p1402) target = $region96
        $region95: #{tpu_custom_call.1} parent=91 // pred_region
          %s1405 = sand.u32 %s380, 1
          %s1406 = scalar_lea.sflag [#allocation3], %s1405
          %s1407 = sand.u32 %s380, 1
          %s1408 = scalar_lea.vmem [#allocation2], %s1407
          %1410 = dma.done %s1406, 16
        $region96: #{tpu_custom_call.1} parent=91 // pred_fallthru
          _
      $region92: #{tpu_custom_call.1} parent=5 // pred_fallthru
        _
    $region6: #{tpu_custom_call.1} parent=1 // loop_footer
      %s29 = sadd.s32 1, %s25
    $region7: #{tpu_custom_call.1} parent=1 // loop_footer_branch
      %24 = sbr.rel target = $region3
    $region8: #{tpu_custom_call.1} parent=1 // loop_exit
      _
    %1411 = vsyncpa [#allocation3], 1
    %s1412 = scalar_lea.sflag [#allocation3], 1
    %1413 = vsyncpa %s1412, 1

</llo_original>
